<compile_context>
chip_gen: v6e
topology: v6e:2x2x1
jax: 0.10.0
libtpu: 0.0.40
codegen_flags: <defaults>
</compile_context>

<pallas_src>
import math

import jax
import jax.numpy as jnp
from jax.experimental import pallas as pl
from jax.experimental.pallas import tpu as pltpu

LANE = 128
SUBLANE = 8


def _round_up(n, m):
    return ((n + m - 1) // m) * m


def _sigmoid(x):
    # Exact sigmoid via a single EUP op (tanh) instead of exp + reciprocal.
    return 0.5 * (jnp.tanh(0.5 * x) + 1.0)


def _device_kind():
    try:
        return jax.devices()[0].device_kind.lower()
    except Exception:
        return ""


def _use_bf16_eup():
    # v5e's VPU/EUP have no bf16 path (would only add converts); v6e/v7x do.
    return "v5" not in _device_kind()


def _auto_block_b(B):
    kind = _device_kind()
    b8 = _round_up(max(B, 1), SUBLANE)
    if "v5" in kind or "v6" in kind:
        # Single TensorCore: the grid is a serial loop -> use the biggest tile
        # (grid=1 for small batches); per-tile footprint is a few MiB << 128 MiB VMEM.
        return min(b8, 1024)
    # v7x / unknown: keep >=4 grid steps when the batch permits, so the
    # "parallel" grid axis shards across both TensorCores with pipelining.
    return max(SUBLANE, min(512, _round_up(max(B // 4, 1), SUBLANE)))


def make_vae_kernel(z_dim, *, bf16_eup):
    """All 6 matmuls (mu/log_var head fused) + ReLU/exp/sigmoid + reparam in one body."""

    def vae_kernel(x_ref, eps_ref,
                   w1_ref, b1_ref, w2_ref, b2_ref, w3_ref, b3_ref,
                   w4_ref, b4_ref, w5_ref, b5_ref, w6_ref, b6_ref,
                   recon_ref, ml_ref):
        f32 = jnp.float32
        bf16 = jnp.bfloat16

        # --- encoder --- (bf16 MXU operands, f32 accumulation)
        h = jnp.dot(x_ref[...], w1_ref[...], preferred_element_type=f32) + b1_ref[...]
        h = jnp.maximum(h, 0.0)                                   # F.relu(fc1(x))
        h = jnp.dot(h.astype(bf16), w2_ref[...], preferred_element_type=f32) + b2_ref[...]
        h = jnp.maximum(h, 0.0)                                   # F.relu(fc2(h))

        # fused fc31 | fc32 head -> [mu | log_var | 0-pad], 128-lane dense store
        ml = jnp.dot(h.astype(bf16), w3_ref[...], preferred_element_type=f32) + b3_ref[...]
        ml_ref[...] = ml
        mu = ml[:, :z_dim]
        log_var = ml[:, z_dim:2 * z_dim]

        # --- sampling (reparameterisation trick) ---
        half_lv = 0.5 * log_var
        if bf16_eup:
            std = jnp.exp(half_lv.astype(bf16)).astype(f32)       # bf16 EUP path (v6e/v7x)
        else:
            std = jnp.exp(half_lv)                                # f32 EUP (v5e)
        z = eps_ref[...] * std + mu                               # eps.mul(std).add(mu)

        # --- decoder ---
        d = jnp.dot(z.astype(bf16), w4_ref[...], preferred_element_type=f32) + b4_ref[...]
        d = jnp.maximum(d, 0.0)                                   # F.relu(fc4(z))
        d = jnp.dot(d.astype(bf16), w5_ref[...], preferred_element_type=f32) + b5_ref[...]
        d = jnp.maximum(d, 0.0)                                   # F.relu(fc5(h))
        logits = jnp.dot(d.astype(bf16), w6_ref[...], preferred_element_type=f32) + b6_ref[...]
        if bf16_eup:
            recon_ref[...] = _sigmoid(logits.astype(bf16)).astype(recon_ref.dtype)
        else:
            recon_ref[...] = _sigmoid(logits).astype(recon_ref.dtype)   # F.sigmoid(fc6(h))

    return vae_kernel


def init_linear(key, in_dim, out_dim):
    """PyTorch-style nn.Linear init: U(-1/sqrt(in), 1/sqrt(in)).
    Weight returned transposed as (in_dim, out_dim) so the kernel does x @ W."""
    k_w, k_b = jax.random.split(key)
    bound = 1.0 / math.sqrt(in_dim)
    w = jax.random.uniform(k_w, (in_dim, out_dim), jnp.float32, -bound, bound)
    b = jax.random.uniform(k_b, (1, out_dim), jnp.float32, -bound, bound)
    return w, b


def make_vae_params(key, x_dim, h_dim_1, h_dim_2, z_dim):
    keys = jax.random.split(key, 7)
    w1, b1 = init_linear(keys[0], x_dim, h_dim_1)
    w2, b2 = init_linear(keys[1], h_dim_1, h_dim_2)
    w31, b31 = init_linear(keys[2], h_dim_2, z_dim)
    w32, b32 = init_linear(keys[3], h_dim_2, z_dim)
    w4, b4 = init_linear(keys[4], z_dim, h_dim_2)
    w5, b5 = init_linear(keys[5], h_dim_2, h_dim_1)
    w6, b6 = init_linear(keys[6], h_dim_1, x_dim)
    return (w1, b1, w2, b2, w31, b31, w32, b32, w4, b4, w5, b5, w6, b6)


def vae_forward(x_nchw, eps, params, *, x_dim, h_dim_1, h_dim_2, z_dim,
                block_b=None, recon_dtype=jnp.bfloat16):
    (w1, b1, w2, b2, w31, b31, w32, b32, w4, b4, w5, b5, w6, b6) = params
    bf = jnp.bfloat16

    # Glue: flatten NCHW to (B, x_dim), exactly like x.view(-1, 784).
    x_flat = x_nchw.reshape(-1, x_dim)
    B = x_flat.shape[0]

    xp = _round_up(x_dim, LANE)              # 784 -> 896 lane-aligned
    hp = _round_up(2 * z_dim, LANE)          # [mu | log_var] head padded to 128 lanes
    tb = block_b if block_b is not None else _auto_block_b(B)   # per-generation tile
    tb = min(_round_up(tb, SUBLANE), _round_up(B, SUBLANE))
    bp = _round_up(B, tb)                    # padded batch

    # Fuse + lane-pad the mu/log_var head; zero-pad x_dim on w1 (K) and w6/b6 (N).
    w3 = jnp.pad(jnp.concatenate([w31, w32], axis=1), ((0, 0), (0, hp - 2 * z_dim)))
    b3 = jnp.pad(jnp.concatenate([b31, b32], axis=1), ((0, 0), (0, hp - 2 * z_dim)))
    w1p = jnp.pad(w1, ((0, xp - x_dim), (0, 0)))
    w6p = jnp.pad(w6, ((0, 0), (0, xp - x_dim)))
    b6p = jnp.pad(b6, ((0, 0), (0, xp - x_dim)))

    weights = (w1p.astype(bf), b1, w2.astype(bf), b2, w3.astype(bf), b3,
               w4.astype(bf), b4, w5.astype(bf), b5, w6p.astype(bf), b6p)

    # Cast to bf16 BEFORE padding -> the wrapper pad pass moves half the bytes.
    x_in = jnp.pad(x_flat.astype(bf), ((0, bp - B), (0, xp - x_dim)))
    eps_in = jnp.pad(eps.astype(jnp.float32), ((0, bp - B), (0, 0)))

    grid = (bp // tb,)
    batched = lambda i: (i, 0)     # activation tiles stream with the grid
    resident = lambda i: (0, 0)    # weights/biases: same block every step -> stay in VMEM

    in_specs = [
        pl.BlockSpec((tb, xp), batched),          # x tile (bf16)
        pl.BlockSpec((tb, z_dim), batched),       # eps tile (f32)
    ] + [pl.BlockSpec(w.shape, resident) for w in weights]

    out_specs = (
        pl.BlockSpec((tb, xp), batched),          # recon tile (bf16, lane-dense)
        pl.BlockSpec((tb, hp), batched),          # [mu | log_var | pad] slab, 128 lanes
    )

    weight_bytes = sum(int(w.size) * w.dtype.itemsize for w in weights)
    flops = 2 * bp * (xp * h_dim_1 + h_dim_1 * h_dim_2 + h_dim_2 * hp
                      + z_dim * h_dim_2 + h_dim_2 * h_dim_1 + h_dim_1 * xp)
    bytes_accessed = (weight_bytes
                      + bp * xp * 2                                   # x in (bf16)
                      + bp * z_dim * 4                                # eps in
                      + bp * xp * jnp.dtype(recon_dtype).itemsize     # recon out
                      + bp * hp * 4)                                  # mu|log_var out
    transcendentals = bp * (z_dim + xp)           # exp + tanh(sigmoid), advisory only

    recon_p, ml = pl.pallas_call(
        make_vae_kernel(z_dim, bf16_eup=_use_bf16_eup()),
        grid=grid,
        in_specs=in_specs,
        out_specs=out_specs,
        out_shape=(
            jax.ShapeDtypeStruct((bp, xp), recon_dtype),
            jax.ShapeDtypeStruct((bp, hp), jnp.float32),
        ),
        compiler_params=pltpu.CompilerParams(
            dimension_semantics=("parallel",),     # megacore sharding on v7x
            vmem_limit_bytes=32 << 20,             # fits v7x's 64 MiB / TC
        ),
        cost_estimate=pl.CostEstimate(
            flops=flops,
            bytes_accessed=bytes_accessed,
            transcendentals=transcendentals,
        ),
    )(x_in, eps_in, *weights)

    recon = recon_p[:B, :x_dim]
    mu = ml[:B, :z_dim]
    log_var = ml[:B, z_dim:2 * z_dim]
    return recon, mu, log_var


if __name__ == "__main__":
    # MNIST-shaped example consistent with forward's view(-1, 784).
    x_dim, h_dim_1, h_dim_2, z_dim = 784, 256, 128, 32
    B = 64

    key = jax.random.PRNGKey(0)
    k_x, k_eps, k_params = jax.random.split(key, 3)

    x = jax.random.uniform(k_x, (B, 1, 28, 28), jnp.float32)        # NCHW input
    eps = jax.random.normal(k_eps, (B, z_dim), jnp.float32)         # torch.randn_like(std)
    params = make_vae_params(k_params, x_dim, h_dim_1, h_dim_2, z_dim)

    recon, mu, log_var = vae_forward(
        x, eps, params,
        x_dim=x_dim, h_dim_1=h_dim_1, h_dim_2=h_dim_2, z_dim=z_dim,
    )
    jax.block_until_ready((recon, mu, log_var))

    assert recon.shape == (B, x_dim)
    assert mu.shape == (B, z_dim) and log_var.shape == (B, z_dim)
    assert bool(jnp.all(jnp.isfinite(recon.astype(jnp.float32))))
    assert bool(jnp.all((recon >= 0.0) & (recon <= 1.0)))
    assert bool(jnp.all(jnp.isfinite(mu))) and bool(jnp.all(jnp.isfinite(log_var)))
    print("KERNEL_OK")
</pallas_src>

<mosaic_0001>
module attributes {stable_mosaic.version = 11 : i64} {
  func.func @vae_kernel(%arg0: i32, %arg1: memref<16x896xbf16, #tpu.memory_space<vmem>>, %arg2: memref<16x32xf32, #tpu.memory_space<vmem>>, %arg3: memref<896x256xbf16, #tpu.memory_space<vmem>>, %arg4: memref<1x256xf32, #tpu.memory_space<vmem>>, %arg5: memref<256x128xbf16, #tpu.memory_space<vmem>>, %arg6: memref<1x128xf32, #tpu.memory_space<vmem>>, %arg7: memref<128x128xbf16, #tpu.memory_space<vmem>>, %arg8: memref<1x128xf32, #tpu.memory_space<vmem>>, %arg9: memref<32x128xbf16, #tpu.memory_space<vmem>>, %arg10: memref<1x128xf32, #tpu.memory_space<vmem>>, %arg11: memref<128x256xbf16, #tpu.memory_space<vmem>>, %arg12: memref<1x256xf32, #tpu.memory_space<vmem>>, %arg13: memref<256x896xbf16, #tpu.memory_space<vmem>>, %arg14: memref<1x896xf32, #tpu.memory_space<vmem>>, %arg15: memref<16x896xbf16, #tpu.memory_space<vmem>>, %arg16: memref<16x128xf32, #tpu.memory_space<vmem>>) attributes {dimension_semantics = [#tpu.dimension_semantics<parallel>], iteration_bounds = array<i64: 4>, scalar_prefetch = 0 : i64, scratch_operands = 0 : i64, tpu.core_type = #tpu.core_type<tc>, window_params = [{transform_indices = @transform_0, window_bounds = array<i64: 16, 896>}, {transform_indices = @transform_1, window_bounds = array<i64: 16, 32>}, {pipeline_mode = #tpu.pipeline_mode<synchronous>, transform_indices = @transform_2, window_bounds = array<i64: 896, 256>}, {pipeline_mode = #tpu.pipeline_mode<synchronous>, transform_indices = @transform_3, window_bounds = array<i64: 1, 256>}, {pipeline_mode = #tpu.pipeline_mode<synchronous>, transform_indices = @transform_4, window_bounds = array<i64: 256, 128>}, {pipeline_mode = #tpu.pipeline_mode<synchronous>, transform_indices = @transform_5, window_bounds = array<i64: 1, 128>}, {pipeline_mode = #tpu.pipeline_mode<synchronous>, transform_indices = @transform_6, window_bounds = array<i64: 128, 128>}, {pipeline_mode = #tpu.pipeline_mode<synchronous>, transform_indices = @transform_7, window_bounds = array<i64: 1, 128>}, {pipeline_mode = #tpu.pipeline_mode<synchronous>, transform_indices = @transform_8, window_bounds = array<i64: 32, 128>}, {pipeline_mode = #tpu.pipeline_mode<synchronous>, transform_indices = @transform_9, window_bounds = array<i64: 1, 128>}, {pipeline_mode = #tpu.pipeline_mode<synchronous>, transform_indices = @transform_10, window_bounds = array<i64: 128, 256>}, {pipeline_mode = #tpu.pipeline_mode<synchronous>, transform_indices = @transform_11, window_bounds = array<i64: 1, 256>}, {pipeline_mode = #tpu.pipeline_mode<synchronous>, transform_indices = @transform_12, window_bounds = array<i64: 256, 896>}, {pipeline_mode = #tpu.pipeline_mode<synchronous>, transform_indices = @transform_13, window_bounds = array<i64: 1, 896>}, {transform_indices = @transform_14, window_bounds = array<i64: 16, 896>}, {transform_indices = @transform_15, window_bounds = array<i64: 16, 128>}]} {
    %c0 = arith.constant 0 : index
    %c0_0 = arith.constant 0 : index
    %0 = vector.load %arg1[%c0, %c0_0] : memref<16x896xbf16, #tpu.memory_space<vmem>>, vector<16x896xbf16>
    %c0_1 = arith.constant 0 : index
    %c0_2 = arith.constant 0 : index
    %1 = vector.load %arg3[%c0_1, %c0_2] : memref<896x256xbf16, #tpu.memory_space<vmem>>, vector<896x256xbf16>
    %cst = arith.constant dense<0.000000e+00> : vector<16x256xf32>
    %2 = tpu.matmul %0, %1, %cst {dimension_numbers = #tpu.dot_dimension_numbers<[1], [0], [0], [1], [0, 0, 1, 1], [], []>} : vector<16x896xbf16>, vector<896x256xbf16>, vector<16x256xf32> -> vector<16x256xf32>
    %c0_3 = arith.constant 0 : index
    %c0_4 = arith.constant 0 : index
    %3 = vector.load %arg4[%c0_3, %c0_4] : memref<1x256xf32, #tpu.memory_space<vmem>>, vector<1x256xf32>
    %4 = vector.broadcast %3 : vector<1x256xf32> to vector<16x256xf32>
    %5 = arith.addf %2, %4 : vector<16x256xf32>
    %cst_5 = arith.constant 0.000000e+00 : f32
    %6 = vector.broadcast %cst_5 : f32 to vector<16x256xf32>
    %7 = arith.maximumf %5, %6 : vector<16x256xf32>
    %8 = arith.truncf %7 : vector<16x256xf32> to vector<16x256xbf16>
    %c0_6 = arith.constant 0 : index
    %c0_7 = arith.constant 0 : index
    %9 = vector.load %arg5[%c0_6, %c0_7] : memref<256x128xbf16, #tpu.memory_space<vmem>>, vector<256x128xbf16>
    %cst_8 = arith.constant dense<0.000000e+00> : vector<16x128xf32>
    %10 = tpu.matmul %8, %9, %cst_8 {dimension_numbers = #tpu.dot_dimension_numbers<[1], [0], [0], [1], [0, 0, 1, 1], [], []>} : vector<16x256xbf16>, vector<256x128xbf16>, vector<16x128xf32> -> vector<16x128xf32>
    %c0_9 = arith.constant 0 : index
    %c0_10 = arith.constant 0 : index
    %11 = vector.load %arg6[%c0_9, %c0_10] : memref<1x128xf32, #tpu.memory_space<vmem>>, vector<1x128xf32>
    %12 = vector.broadcast %11 : vector<1x128xf32> to vector<16x128xf32>
    %13 = arith.addf %10, %12 : vector<16x128xf32>
    %cst_11 = arith.constant 0.000000e+00 : f32
    %14 = vector.broadcast %cst_11 : f32 to vector<16x128xf32>
    %15 = arith.maximumf %13, %14 : vector<16x128xf32>
    %16 = arith.truncf %15 : vector<16x128xf32> to vector<16x128xbf16>
    %c0_12 = arith.constant 0 : index
    %c0_13 = arith.constant 0 : index
    %17 = vector.load %arg7[%c0_12, %c0_13] : memref<128x128xbf16, #tpu.memory_space<vmem>>, vector<128x128xbf16>
    %cst_14 = arith.constant dense<0.000000e+00> : vector<16x128xf32>
    %18 = tpu.matmul %16, %17, %cst_14 {dimension_numbers = #tpu.dot_dimension_numbers<[1], [0], [0], [1], [0, 0, 1, 1], [], []>} : vector<16x128xbf16>, vector<128x128xbf16>, vector<16x128xf32> -> vector<16x128xf32>
    %c0_15 = arith.constant 0 : index
    %c0_16 = arith.constant 0 : index
    %19 = vector.load %arg8[%c0_15, %c0_16] : memref<1x128xf32, #tpu.memory_space<vmem>>, vector<1x128xf32>
    %20 = vector.broadcast %19 : vector<1x128xf32> to vector<16x128xf32>
    %21 = arith.addf %18, %20 : vector<16x128xf32>
    %c0_17 = arith.constant 0 : index
    %c0_18 = arith.constant 0 : index
    %22 = vector.load %arg16[%c0_17, %c0_18] : memref<16x128xf32, #tpu.memory_space<vmem>>, vector<16x128xf32>
    tpu.vector_store %arg16[%c0_17, %c0_18], %21 {strides = array<i32>} : memref<16x128xf32, #tpu.memory_space<vmem>>, vector<16x128xf32>,
    %23 = vector.extract_strided_slice %21 {offsets = [0, 0], sizes = [16, 32], strides = [1, 1]} : vector<16x128xf32> to vector<16x32xf32>
    %24 = vector.extract_strided_slice %21 {offsets = [0, 32], sizes = [16, 32], strides = [1, 1]} : vector<16x128xf32> to vector<16x32xf32>
    %cst_19 = arith.constant 5.000000e-01 : f32
    %25 = vector.broadcast %cst_19 : f32 to vector<16x32xf32>
    %26 = arith.mulf %25, %24 : vector<16x32xf32>
    %27 = arith.truncf %26 : vector<16x32xf32> to vector<16x32xbf16>
    %28 = math.exp %27 : vector<16x32xbf16>
    %29 = arith.extf %28 : vector<16x32xbf16> to vector<16x32xf32>
    %c0_20 = arith.constant 0 : index
    %c0_21 = arith.constant 0 : index
    %30 = vector.load %arg2[%c0_20, %c0_21] : memref<16x32xf32, #tpu.memory_space<vmem>>, vector<16x32xf32>
    %31 = arith.mulf %30, %29 : vector<16x32xf32>
    %32 = arith.addf %31, %23 : vector<16x32xf32>
    %33 = arith.truncf %32 : vector<16x32xf32> to vector<16x32xbf16>
    %c0_22 = arith.constant 0 : index
    %c0_23 = arith.constant 0 : index
    %34 = vector.load %arg9[%c0_22, %c0_23] : memref<32x128xbf16, #tpu.memory_space<vmem>>, vector<32x128xbf16>
    %cst_24 = arith.constant dense<0.000000e+00> : vector<16x128xf32>
    %35 = tpu.matmul %33, %34, %cst_24 {dimension_numbers = #tpu.dot_dimension_numbers<[1], [0], [0], [1], [0, 0, 1, 1], [], []>} : vector<16x32xbf16>, vector<32x128xbf16>, vector<16x128xf32> -> vector<16x128xf32>
    %c0_25 = arith.constant 0 : index
    %c0_26 = arith.constant 0 : index
    %36 = vector.load %arg10[%c0_25, %c0_26] : memref<1x128xf32, #tpu.memory_space<vmem>>, vector<1x128xf32>
    %37 = vector.broadcast %36 : vector<1x128xf32> to vector<16x128xf32>
    %38 = arith.addf %35, %37 : vector<16x128xf32>
    %cst_27 = arith.constant 0.000000e+00 : f32
    %39 = vector.broadcast %cst_27 : f32 to vector<16x128xf32>
    %40 = arith.maximumf %38, %39 : vector<16x128xf32>
    %41 = arith.truncf %40 : vector<16x128xf32> to vector<16x128xbf16>
    %c0_28 = arith.constant 0 : index
    %c0_29 = arith.constant 0 : index
    %42 = vector.load %arg11[%c0_28, %c0_29] : memref<128x256xbf16, #tpu.memory_space<vmem>>, vector<128x256xbf16>
    %cst_30 = arith.constant dense<0.000000e+00> : vector<16x256xf32>
    %43 = tpu.matmul %41, %42, %cst_30 {dimension_numbers = #tpu.dot_dimension_numbers<[1], [0], [0], [1], [0, 0, 1, 1], [], []>} : vector<16x128xbf16>, vector<128x256xbf16>, vector<16x256xf32> -> vector<16x256xf32>
    %c0_31 = arith.constant 0 : index
    %c0_32 = arith.constant 0 : index
    %44 = vector.load %arg12[%c0_31, %c0_32] : memref<1x256xf32, #tpu.memory_space<vmem>>, vector<1x256xf32>
    %45 = vector.broadcast %44 : vector<1x256xf32> to vector<16x256xf32>
    %46 = arith.addf %43, %45 : vector<16x256xf32>
    %cst_33 = arith.constant 0.000000e+00 : f32
    %47 = vector.broadcast %cst_33 : f32 to vector<16x256xf32>
    %48 = arith.maximumf %46, %47 : vector<16x256xf32>
    %49 = arith.truncf %48 : vector<16x256xf32> to vector<16x256xbf16>
    %c0_34 = arith.constant 0 : index
    %c0_35 = arith.constant 0 : index
    %50 = vector.load %arg13[%c0_34, %c0_35] : memref<256x896xbf16, #tpu.memory_space<vmem>>, vector<256x896xbf16>
    %cst_36 = arith.constant dense<0.000000e+00> : vector<16x896xf32>
    %51 = tpu.matmul %49, %50, %cst_36 {dimension_numbers = #tpu.dot_dimension_numbers<[1], [0], [0], [1], [0, 0, 1, 1], [], []>} : vector<16x256xbf16>, vector<256x896xbf16>, vector<16x896xf32> -> vector<16x896xf32>
    %c0_37 = arith.constant 0 : index
    %c0_38 = arith.constant 0 : index
    %52 = vector.load %arg14[%c0_37, %c0_38] : memref<1x896xf32, #tpu.memory_space<vmem>>, vector<1x896xf32>
    %53 = vector.broadcast %52 : vector<1x896xf32> to vector<16x896xf32>
    %54 = arith.addf %51, %53 : vector<16x896xf32>
    %55 = arith.truncf %54 : vector<16x896xf32> to vector<16x896xbf16>
    %cst_39 = arith.constant 5.000000e-01 : bf16
    %56 = vector.broadcast %cst_39 : bf16 to vector<16x896xbf16>
    %57 = arith.mulf %56, %55 : vector<16x896xbf16>
    %58 = math.tanh %57 : vector<16x896xbf16>
    %cst_40 = arith.constant 1.000000e+00 : bf16
    %59 = vector.broadcast %cst_40 : bf16 to vector<16x896xbf16>
    %60 = arith.addf %58, %59 : vector<16x896xbf16>
    %cst_41 = arith.constant 5.000000e-01 : bf16
    %61 = vector.broadcast %cst_41 : bf16 to vector<16x896xbf16>
    %62 = arith.mulf %61, %60 : vector<16x896xbf16>
    %c0_42 = arith.constant 0 : index
    %c0_43 = arith.constant 0 : index
    %63 = vector.load %arg15[%c0_42, %c0_43] : memref<16x896xbf16, #tpu.memory_space<vmem>>, vector<16x896xbf16>
    tpu.vector_store %arg15[%c0_42, %c0_43], %62 {strides = array<i32>} : memref<16x896xbf16, #tpu.memory_space<vmem>>, vector<16x896xbf16>,
    return
  }
  func.func @transform_0(%arg0: i32) -> (i32, i32) {
    %c0_i32 = arith.constant 0 : i32
    %c0_i32_0 = arith.constant 0 : i32
    return %arg0, %c0_i32 : i32, i32
  }
  func.func @transform_1(%arg0: i32) -> (i32, i32) {
    %c0_i32 = arith.constant 0 : i32
    %c0_i32_0 = arith.constant 0 : i32
    return %arg0, %c0_i32 : i32, i32
  }
  func.func @transform_2(%arg0: i32) -> (i32, i32) {
    %c0_i32 = arith.constant 0 : i32
    %c0_i32_0 = arith.constant 0 : i32
    %c0_i32_1 = arith.constant 0 : i32
    return %c0_i32, %c0_i32_0 : i32, i32
  }
  func.func @transform_3(%arg0: i32) -> (i32, i32) {
    %c0_i32 = arith.constant 0 : i32
    %c0_i32_0 = arith.constant 0 : i32
    %c0_i32_1 = arith.constant 0 : i32
    return %c0_i32, %c0_i32_0 : i32, i32
  }
  func.func @transform_4(%arg0: i32) -> (i32, i32) {
    %c0_i32 = arith.constant 0 : i32
    %c0_i32_0 = arith.constant 0 : i32
    %c0_i32_1 = arith.constant 0 : i32
    return %c0_i32, %c0_i32_0 : i32, i32
  }
  func.func @transform_5(%arg0: i32) -> (i32, i32) {
    %c0_i32 = arith.constant 0 : i32
    %c0_i32_0 = arith.constant 0 : i32
    %c0_i32_1 = arith.constant 0 : i32
    return %c0_i32, %c0_i32_0 : i32, i32
  }
  func.func @transform_6(%arg0: i32) -> (i32, i32) {
    %c0_i32 = arith.constant 0 : i32
    %c0_i32_0 = arith.constant 0 : i32
    %c0_i32_1 = arith.constant 0 : i32
    return %c0_i32, %c0_i32_0 : i32, i32
  }
  func.func @transform_7(%arg0: i32) -> (i32, i32) {
    %c0_i32 = arith.constant 0 : i32
    %c0_i32_0 = arith.constant 0 : i32
    %c0_i32_1 = arith.constant 0 : i32
    return %c0_i32, %c0_i32_0 : i32, i32
  }
  func.func @transform_8(%arg0: i32) -> (i32, i32) {
    %c0_i32 = arith.constant 0 : i32
    %c0_i32_0 = arith.constant 0 : i32
    %c0_i32_1 = arith.constant 0 : i32
    return %c0_i32, %c0_i32_0 : i32, i32
  }
  func.func @transform_9(%arg0: i32) -> (i32, i32) {
    %c0_i32 = arith.constant 0 : i32
    %c0_i32_0 = arith.constant 0 : i32
    %c0_i32_1 = arith.constant 0 : i32
    return %c0_i32, %c0_i32_0 : i32, i32
  }
  func.func @transform_10(%arg0: i32) -> (i32, i32) {
    %c0_i32 = arith.constant 0 : i32
    %c0_i32_0 = arith.constant 0 : i32
    %c0_i32_1 = arith.constant 0 : i32
    return %c0_i32, %c0_i32_0 : i32, i32
  }
  func.func @transform_11(%arg0: i32) -> (i32, i32) {
    %c0_i32 = arith.constant 0 : i32
    %c0_i32_0 = arith.constant 0 : i32
    %c0_i32_1 = arith.constant 0 : i32
    return %c0_i32, %c0_i32_0 : i32, i32
  }
  func.func @transform_12(%arg0: i32) -> (i32, i32) {
    %c0_i32 = arith.constant 0 : i32
    %c0_i32_0 = arith.constant 0 : i32
    %c0_i32_1 = arith.constant 0 : i32
    return %c0_i32, %c0_i32_0 : i32, i32
  }
  func.func @transform_13(%arg0: i32) -> (i32, i32) {
    %c0_i32 = arith.constant 0 : i32
    %c0_i32_0 = arith.constant 0 : i32
    %c0_i32_1 = arith.constant 0 : i32
    return %c0_i32, %c0_i32_0 : i32, i32
  }
  func.func @transform_14(%arg0: i32) -> (i32, i32) {
    %c0_i32 = arith.constant 0 : i32
    %c0_i32_0 = arith.constant 0 : i32
    return %arg0, %c0_i32 : i32, i32
  }
  func.func @transform_15(%arg0: i32) -> (i32, i32) {
    %c0_i32 = arith.constant 0 : i32
    %c0_i32_0 = arith.constant 0 : i32
    return %arg0, %c0_i32 : i32, i32
  }
}

</mosaic_0001>

<llo_original>
// kernel: tpu_custom_call.1
$region0: #{tpu_custom_call.1}
  #allocation0 [shape = 'u32[]', space=smem, size = 0x4, offset = 0x4, fixed_abs, tag = 'smem constant byte address 0x4 - core index']
  #allocation1 [shape = 'u32[144,128]{1,0:T(1,128)}', space=vmem, size = 0x12000, scoped, tag = 'internal scratch']
  %s0 = inlined_call_operand.hbm [shape: bf16[64,896], index: 0, kind: input, shape index: {}]
  %s1 = inlined_call_operand.vmem [shape: f32[64,32], index: 1, kind: input, shape index: {}]
  %s2 = inlined_call_operand.hbm [shape: bf16[896,256], index: 2, kind: input, shape index: {}]
  %s3 = inlined_call_operand.vmem [shape: f32[1,256], index: 3, kind: input, shape index: {}]
  %s4 = inlined_call_operand.hbm [shape: bf16[256,128], index: 4, kind: input, shape index: {}]
  %s5 = inlined_call_operand.vmem [shape: f32[1,128], index: 5, kind: input, shape index: {}]
  %s6 = inlined_call_operand.vmem [shape: bf16[128,128], index: 6, kind: input, shape index: {}]
  %s7 = inlined_call_operand.vmem [shape: f32[1,128], index: 7, kind: input, shape index: {}]
  %s8 = inlined_call_operand.vmem [shape: bf16[32,128], index: 8, kind: input, shape index: {}]
  %s9 = inlined_call_operand.vmem [shape: f32[1,128], index: 9, kind: input, shape index: {}]
  %s10 = inlined_call_operand.hbm [shape: bf16[128,256], index: 10, kind: input, shape index: {}]
  %s11 = inlined_call_operand.vmem [shape: f32[1,256], index: 11, kind: input, shape index: {}]
  %s12 = inlined_call_operand.hbm [shape: bf16[256,896], index: 12, kind: input, shape index: {}]
  %s13 = inlined_call_operand.vmem [shape: f32[1,896], index: 13, kind: input, shape index: {}]
  %s14 = inlined_call_operand.hbm [shape: bf16[64,896], index: 14, kind: output, shape index: {0}]
  %s15 = inlined_call_operand.hbm [shape: f32[64,128], index: 15, kind: output, shape index: {1}]
  %16 = xla_tuple %s14, %s15
  %s17 = sld [smem:[#allocation0]]
  $region117: #{tpu_custom_call.1} parent=0
    _
  %s19 = ssub.s32 1, %s17
  %s20 = scalar_select 0, %s19, %s17
  $region1: #{tpu_custom_call.1} parent=0
    #allocation2 [shape = 'u8[57344]{0}', space=vmem, size = 0xe000, scoped, tag = 'input window, operand 0']
    #allocation3 [shape = 's32[2]{0}', space=sflag, size = 0x8, scoped, tag = 'scoped memory for tpu_custom_call.1']
    #allocation4 [shape = 's32[2]{0}', space=sflag, size = 0x8, scoped, tag = 'scoped memory for tpu_custom_call.1']
    #allocation5 [shape = 'u8[458752]{0}', space=vmem, size = 0x70000, scoped, tag = 'input window, operand 2, single buffered']
    #allocation6 [shape = 's32[1]{0}', space=sflag, size = 0x4, scoped, tag = 'scoped memory for tpu_custom_call.1']
    #allocation7 [shape = 'u8[65536]{0}', space=vmem, size = 0x10000, scoped, tag = 'input window, operand 4, single buffered']
    #allocation8 [shape = 'u8[65536]{0}', space=vmem, size = 0x10000, scoped, tag = 'input window, operand 10, single buffered']
    #allocation9 [shape = 's32[1]{0}', space=sflag, size = 0x4, scoped, tag = 'scoped memory for tpu_custom_call.1']
    #allocation10 [shape = 'u8[458752]{0}', space=vmem, size = 0x70000, scoped, tag = 'input window, operand 12, single buffered']
    #allocation11 [shape = 'u8[57344]{0}', space=vmem, size = 0xe000, scoped, tag = 'output window, operand 0']
    #allocation12 [shape = 'u8[16384]{0}', space=vmem, size = 0x4000, scoped, tag = 'output window, operand 1']
    #allocation13 [shape = 's32[2]{0}', space=sflag, size = 0x8, scoped, tag = 'scoped memory for tpu_custom_call.1']
    %21 = vsyncpa [#allocation3], 0
    %s22 = scalar_lea.sflag [#allocation3], 1
    %23 = vsyncpa %s22, 0
    %24 = vsyncpa [#allocation6], 0
    %25 = vsyncpa [#allocation9], 0
    %26 = vsyncpa [#allocation4], 0
    %s27 = scalar_lea.sflag [#allocation4], 1
    %28 = vsyncpa %s27, 0
    %29 = vsyncpa [#allocation13], 0
    %s30 = scalar_lea.sflag [#allocation13], 1
    %31 = vsyncpa %s30, 0
    loop: start=0, step=1, limit=6
    $region2: #{tpu_custom_call.1} parent=1 // loop_pre_header
      _
    $region3: #{tpu_custom_call.1} parent=1 // loop_header
      %s33 = sphi 0, %s37
      %p34 = scmp.ge.s32.totalorder %s33, 6
      %s43 = sphi 0, %s45
      %s46 = sphi 0, %s43
      %s47 = sphi 0, %s46
      %s63 = sphi 0, %s47
      %s69 = sphi 0, %s71
      %s72 = sphi 0, %s69
      %s73 = sphi 0, %s72
      %s89 = sphi 0, %s73
      %s93 = sphi 0, %s93
      %s95 = sphi 0, %s93
      %s96 = sphi 0, %s95
      %s110 = sphi 0, %s96
      %s114 = sphi 0, %s114
      %s116 = sphi 0, %s114
      %s117 = sphi 0, %s116
      %s131 = sphi 0, %s117
      %s135 = sphi 0, %s135
      %s137 = sphi 0, %s135
      %s138 = sphi 0, %s137
      %s152 = sphi 0, %s138
      %s156 = sphi 0, %s156
      %s158 = sphi 0, %s156
      %s159 = sphi 0, %s158
      %s173 = sphi 0, %s159
      %s177 = sphi 0, %s177
      %s179 = sphi 0, %s177
      %s180 = sphi 0, %s179
      %s194 = sphi 0, %s180
      %s198 = sphi 0, %s198
      %s200 = sphi 0, %s198
      %s201 = sphi 0, %s200
      %s215 = sphi 0, %s201
      %s219 = sphi 0, %s219
      %s221 = sphi 0, %s219
      %s222 = sphi 0, %s221
      %s236 = sphi 0, %s222
      %s240 = sphi 0, %s240
      %s242 = sphi 0, %s240
      %s243 = sphi 0, %s242
      %s257 = sphi 0, %s243
      %s261 = sphi 0, %s261
      %s263 = sphi 0, %s261
      %s264 = sphi 0, %s263
      %s278 = sphi 0, %s264
      %s282 = sphi 0, %s282
      %s284 = sphi 0, %s282
      %s285 = sphi 0, %s284
      %s299 = sphi 0, %s285
      %s303 = sphi 0, %s303
      %s305 = sphi 0, %s303
      %s306 = sphi 0, %s305
      %s320 = sphi 0, %s306
      %s324 = sphi 0, %s324
      %s326 = sphi 0, %s324
      %s327 = sphi 0, %s326
      %s341 = sphi 0, %s327
      %s347 = sphi 0, %s349
      %s350 = sphi 0, %s347
      %s351 = sphi 0, %s350
      %s367 = sphi 0, %s351
      %s373 = sphi 0, %s375
      %s376 = sphi 0, %s373
      %s377 = sphi 0, %s376
      %s393 = sphi 0, %s377
    $region4: #{tpu_custom_call.1} parent=1 // loop_header_branch
      %36 = sbr.rel (%p34) target = $region8
    $region5: #{tpu_custom_call.1} parent=1 // loop_body
      %s38 = ssub.s32 %s33, 1
      %s39 = ssub.s32 %s33, 2
      %s40 = sadd.s32 %s33, 1
      %s41 = ssub.s32 %s33, %s40
      %p42 = scmp.eq.s32.totalorder %s41, 0
      %s44 = sadd.s32 %s43, 1
      %s45 = scalar_select %p42, %s43, %s44
      %p48 = pneg %p42
      %p49 = scmp.eq.s32.totalorder %s33, 3
      %p50 = por %p48, %p49
      %p51 = scmp.ne.s32.totalorder %s43, %s46
      %p52 = scmp.eq.s32.totalorder %s33, 0
      %p53 = por %p51, %p52
      %p54 = scmp.ne.s32.totalorder %s43, %s46
      %p55 = scmp.eq.s32.totalorder %s38, 3
      %p56 = por %p54, %p55
      %p57 = scmp.ne.s32.totalorder %s46, %s47
      %p58 = scmp.eq.s32.totalorder %s38, 0
      %p59 = por %p57, %p58
      %p60 = scmp.ne.s32.totalorder %s46, %s47
      %p61 = scmp.eq.s32.totalorder %s39, 3
      %p62 = por %p60, %p61
      %p64 = scmp.ne.s32.totalorder %s47, %s63
      %p65 = scmp.eq.s32.totalorder %s39, 0
      %p66 = por %p64, %p65
      %s67 = ssub.s32 %s33, %s40
      %p68 = scmp.eq.s32.totalorder %s67, 0
      %s70 = sadd.s32 %s69, 1
      %s71 = scalar_select %p68, %s69, %s70
      %p74 = pneg %p68
      %p75 = scmp.eq.s32.totalorder %s33, 3
      %p76 = por %p74, %p75
      %p77 = scmp.ne.s32.totalorder %s69, %s72
      %p78 = scmp.eq.s32.totalorder %s33, 0
      %p79 = por %p77, %p78
      %p80 = scmp.ne.s32.totalorder %s69, %s72
      %p81 = scmp.eq.s32.totalorder %s38, 3
      %p82 = por %p80, %p81
      %p83 = scmp.ne.s32.totalorder %s72, %s73
      %p84 = scmp.eq.s32.totalorder %s38, 0
      %p85 = por %p83, %p84
      %p86 = scmp.ne.s32.totalorder %s72, %s73
      %p87 = scmp.eq.s32.totalorder %s39, 3
      %p88 = por %p86, %p87
      %p90 = scmp.ne.s32.totalorder %s73, %s89
      %p91 = scmp.eq.s32.totalorder %s39, 0
      %p92 = por %p90, %p91
      %s94 = sadd.s32 %s93, 1
      %p97 = scmp.eq.s32.totalorder %s33, 3
      %p98 = scmp.ne.s32.totalorder %s93, %s95
      %p99 = scmp.eq.s32.totalorder %s33, 0
      %p100 = por %p98, %p99
      %p101 = scmp.ne.s32.totalorder %s93, %s95
      %p102 = scmp.eq.s32.totalorder %s38, 3
      %p103 = por %p101, %p102
      %p104 = scmp.ne.s32.totalorder %s95, %s96
      %p105 = scmp.eq.s32.totalorder %s38, 0
      %p106 = por %p104, %p105
      %p107 = scmp.ne.s32.totalorder %s95, %s96
      %p108 = scmp.eq.s32.totalorder %s39, 3
      %p109 = por %p107, %p108
      %p111 = scmp.ne.s32.totalorder %s96, %s110
      %p112 = scmp.eq.s32.totalorder %s39, 0
      %p113 = por %p111, %p112
      %s115 = sadd.s32 %s114, 1
      %p118 = scmp.eq.s32.totalorder %s33, 3
      %p119 = scmp.ne.s32.totalorder %s114, %s116
      %p120 = scmp.eq.s32.totalorder %s33, 0
      %p121 = por %p119, %p120
      %p122 = scmp.ne.s32.totalorder %s114, %s116
      %p123 = scmp.eq.s32.totalorder %s38, 3
      %p124 = por %p122, %p123
      %p125 = scmp.ne.s32.totalorder %s116, %s117
      %p126 = scmp.eq.s32.totalorder %s38, 0
      %p127 = por %p125, %p126
      %p128 = scmp.ne.s32.totalorder %s116, %s117
      %p129 = scmp.eq.s32.totalorder %s39, 3
      %p130 = por %p128, %p129
      %p132 = scmp.ne.s32.totalorder %s117, %s131
      %p133 = scmp.eq.s32.totalorder %s39, 0
      %p134 = por %p132, %p133
      %s136 = sadd.s32 %s135, 1
      %p139 = scmp.eq.s32.totalorder %s33, 3
      %p140 = scmp.ne.s32.totalorder %s135, %s137
      %p141 = scmp.eq.s32.totalorder %s33, 0
      %p142 = por %p140, %p141
      %p143 = scmp.ne.s32.totalorder %s135, %s137
      %p144 = scmp.eq.s32.totalorder %s38, 3
      %p145 = por %p143, %p144
      %p146 = scmp.ne.s32.totalorder %s137, %s138
      %p147 = scmp.eq.s32.totalorder %s38, 0
      %p148 = por %p146, %p147
      %p149 = scmp.ne.s32.totalorder %s137, %s138
      %p150 = scmp.eq.s32.totalorder %s39, 3
      %p151 = por %p149, %p150
      %p153 = scmp.ne.s32.totalorder %s138, %s152
      %p154 = scmp.eq.s32.totalorder %s39, 0
      %p155 = por %p153, %p154
      %s157 = sadd.s32 %s156, 1
      %p160 = scmp.eq.s32.totalorder %s33, 3
      %p161 = scmp.ne.s32.totalorder %s156, %s158
      %p162 = scmp.eq.s32.totalorder %s33, 0
      %p163 = por %p161, %p162
      %p164 = scmp.ne.s32.totalorder %s156, %s158
      %p165 = scmp.eq.s32.totalorder %s38, 3
      %p166 = por %p164, %p165
      %p167 = scmp.ne.s32.totalorder %s158, %s159
      %p168 = scmp.eq.s32.totalorder %s38, 0
      %p169 = por %p167, %p168
      %p170 = scmp.ne.s32.totalorder %s158, %s159
      %p171 = scmp.eq.s32.totalorder %s39, 3
      %p172 = por %p170, %p171
      %p174 = scmp.ne.s32.totalorder %s159, %s173
      %p175 = scmp.eq.s32.totalorder %s39, 0
      %p176 = por %p174, %p175
      %s178 = sadd.s32 %s177, 1
      %p181 = scmp.eq.s32.totalorder %s33, 3
      %p182 = scmp.ne.s32.totalorder %s177, %s179
      %p183 = scmp.eq.s32.totalorder %s33, 0
      %p184 = por %p182, %p183
      %p185 = scmp.ne.s32.totalorder %s177, %s179
      %p186 = scmp.eq.s32.totalorder %s38, 3
      %p187 = por %p185, %p186
      %p188 = scmp.ne.s32.totalorder %s179, %s180
      %p189 = scmp.eq.s32.totalorder %s38, 0
      %p190 = por %p188, %p189
      %p191 = scmp.ne.s32.totalorder %s179, %s180
      %p192 = scmp.eq.s32.totalorder %s39, 3
      %p193 = por %p191, %p192
      %p195 = scmp.ne.s32.totalorder %s180, %s194
      %p196 = scmp.eq.s32.totalorder %s39, 0
      %p197 = por %p195, %p196
      %s199 = sadd.s32 %s198, 1
      %p202 = scmp.eq.s32.totalorder %s33, 3
      %p203 = scmp.ne.s32.totalorder %s198, %s200
      %p204 = scmp.eq.s32.totalorder %s33, 0
      %p205 = por %p203, %p204
      %p206 = scmp.ne.s32.totalorder %s198, %s200
      %p207 = scmp.eq.s32.totalorder %s38, 3
      %p208 = por %p206, %p207
      %p209 = scmp.ne.s32.totalorder %s200, %s201
      %p210 = scmp.eq.s32.totalorder %s38, 0
      %p211 = por %p209, %p210
      %p212 = scmp.ne.s32.totalorder %s200, %s201
      %p213 = scmp.eq.s32.totalorder %s39, 3
      %p214 = por %p212, %p213
      %p216 = scmp.ne.s32.totalorder %s201, %s215
      %p217 = scmp.eq.s32.totalorder %s39, 0
      %p218 = por %p216, %p217
      %s220 = sadd.s32 %s219, 1
      %p223 = scmp.eq.s32.totalorder %s33, 3
      %p224 = scmp.ne.s32.totalorder %s219, %s221
      %p225 = scmp.eq.s32.totalorder %s33, 0
      %p226 = por %p224, %p225
      %p227 = scmp.ne.s32.totalorder %s219, %s221
      %p228 = scmp.eq.s32.totalorder %s38, 3
      %p229 = por %p227, %p228
      %p230 = scmp.ne.s32.totalorder %s221, %s222
      %p231 = scmp.eq.s32.totalorder %s38, 0
      %p232 = por %p230, %p231
      %p233 = scmp.ne.s32.totalorder %s221, %s222
      %p234 = scmp.eq.s32.totalorder %s39, 3
      %p235 = por %p233, %p234
      %p237 = scmp.ne.s32.totalorder %s222, %s236
      %p238 = scmp.eq.s32.totalorder %s39, 0
      %p239 = por %p237, %p238
      %s241 = sadd.s32 %s240, 1
      %p244 = scmp.eq.s32.totalorder %s33, 3
      %p245 = scmp.ne.s32.totalorder %s240, %s242
      %p246 = scmp.eq.s32.totalorder %s33, 0
      %p247 = por %p245, %p246
      %p248 = scmp.ne.s32.totalorder %s240, %s242
      %p249 = scmp.eq.s32.totalorder %s38, 3
      %p250 = por %p248, %p249
      %p251 = scmp.ne.s32.totalorder %s242, %s243
      %p252 = scmp.eq.s32.totalorder %s38, 0
      %p253 = por %p251, %p252
      %p254 = scmp.ne.s32.totalorder %s242, %s243
      %p255 = scmp.eq.s32.totalorder %s39, 3
      %p256 = por %p254, %p255
      %p258 = scmp.ne.s32.totalorder %s243, %s257
      %p259 = scmp.eq.s32.totalorder %s39, 0
      %p260 = por %p258, %p259
      %s262 = sadd.s32 %s261, 1
      %p265 = scmp.eq.s32.totalorder %s33, 3
      %p266 = scmp.ne.s32.totalorder %s261, %s263
      %p267 = scmp.eq.s32.totalorder %s33, 0
      %p268 = por %p266, %p267
      %p269 = scmp.ne.s32.totalorder %s261, %s263
      %p270 = scmp.eq.s32.totalorder %s38, 3
      %p271 = por %p269, %p270
      %p272 = scmp.ne.s32.totalorder %s263, %s264
      %p273 = scmp.eq.s32.totalorder %s38, 0
      %p274 = por %p272, %p273
      %p275 = scmp.ne.s32.totalorder %s263, %s264
      %p276 = scmp.eq.s32.totalorder %s39, 3
      %p277 = por %p275, %p276
      %p279 = scmp.ne.s32.totalorder %s264, %s278
      %p280 = scmp.eq.s32.totalorder %s39, 0
      %p281 = por %p279, %p280
      %s283 = sadd.s32 %s282, 1
      %p286 = scmp.eq.s32.totalorder %s33, 3
      %p287 = scmp.ne.s32.totalorder %s282, %s284
      %p288 = scmp.eq.s32.totalorder %s33, 0
      %p289 = por %p287, %p288
      %p290 = scmp.ne.s32.totalorder %s282, %s284
      %p291 = scmp.eq.s32.totalorder %s38, 3
      %p292 = por %p290, %p291
      %p293 = scmp.ne.s32.totalorder %s284, %s285
      %p294 = scmp.eq.s32.totalorder %s38, 0
      %p295 = por %p293, %p294
      %p296 = scmp.ne.s32.totalorder %s284, %s285
      %p297 = scmp.eq.s32.totalorder %s39, 3
      %p298 = por %p296, %p297
      %p300 = scmp.ne.s32.totalorder %s285, %s299
      %p301 = scmp.eq.s32.totalorder %s39, 0
      %p302 = por %p300, %p301
      %s304 = sadd.s32 %s303, 1
      %p307 = scmp.eq.s32.totalorder %s33, 3
      %p308 = scmp.ne.s32.totalorder %s303, %s305
      %p309 = scmp.eq.s32.totalorder %s33, 0
      %p310 = por %p308, %p309
      %p311 = scmp.ne.s32.totalorder %s303, %s305
      %p312 = scmp.eq.s32.totalorder %s38, 3
      %p313 = por %p311, %p312
      %p314 = scmp.ne.s32.totalorder %s305, %s306
      %p315 = scmp.eq.s32.totalorder %s38, 0
      %p316 = por %p314, %p315
      %p317 = scmp.ne.s32.totalorder %s305, %s306
      %p318 = scmp.eq.s32.totalorder %s39, 3
      %p319 = por %p317, %p318
      %p321 = scmp.ne.s32.totalorder %s306, %s320
      %p322 = scmp.eq.s32.totalorder %s39, 0
      %p323 = por %p321, %p322
      %s325 = sadd.s32 %s324, 1
      %p328 = scmp.eq.s32.totalorder %s33, 3
      %p329 = scmp.ne.s32.totalorder %s324, %s326
      %p330 = scmp.eq.s32.totalorder %s33, 0
      %p331 = por %p329, %p330
      %p332 = scmp.ne.s32.totalorder %s324, %s326
      %p333 = scmp.eq.s32.totalorder %s38, 3
      %p334 = por %p332, %p333
      %p335 = scmp.ne.s32.totalorder %s326, %s327
      %p336 = scmp.eq.s32.totalorder %s38, 0
      %p337 = por %p335, %p336
      %p338 = scmp.ne.s32.totalorder %s326, %s327
      %p339 = scmp.eq.s32.totalorder %s39, 3
      %p340 = por %p338, %p339
      %p342 = scmp.ne.s32.totalorder %s327, %s341
      %p343 = scmp.eq.s32.totalorder %s39, 0
      %p344 = por %p342, %p343
      %s345 = ssub.s32 %s33, %s40
      %p346 = scmp.eq.s32.totalorder %s345, 0
      %s348 = sadd.s32 %s347, 1
      %s349 = scalar_select %p346, %s347, %s348
      %p352 = pneg %p346
      %p353 = scmp.eq.s32.totalorder %s33, 3
      %p354 = por %p352, %p353
      %p355 = scmp.ne.s32.totalorder %s347, %s350
      %p356 = scmp.eq.s32.totalorder %s33, 0
      %p357 = por %p355, %p356
      %p358 = scmp.ne.s32.totalorder %s347, %s350
      %p359 = scmp.eq.s32.totalorder %s38, 3
      %p360 = por %p358, %p359
      %p361 = scmp.ne.s32.totalorder %s350, %s351
      %p362 = scmp.eq.s32.totalorder %s38, 0
      %p363 = por %p361, %p362
      %p364 = scmp.ne.s32.totalorder %s350, %s351
      %p365 = scmp.eq.s32.totalorder %s39, 3
      %p366 = por %p364, %p365
      %p368 = scmp.ne.s32.totalorder %s351, %s367
      %p369 = scmp.eq.s32.totalorder %s39, 0
      %p370 = por %p368, %p369
      %s371 = ssub.s32 %s33, %s40
      %p372 = scmp.eq.s32.totalorder %s371, 0
      %s374 = sadd.s32 %s373, 1
      %s375 = scalar_select %p372, %s373, %s374
      %p378 = pneg %p372
      %p379 = scmp.eq.s32.totalorder %s33, 3
      %p380 = por %p378, %p379
      %p381 = scmp.ne.s32.totalorder %s373, %s376
      %p382 = scmp.eq.s32.totalorder %s33, 0
      %p383 = por %p381, %p382
      %p384 = scmp.ne.s32.totalorder %s373, %s376
      %p385 = scmp.eq.s32.totalorder %s38, 3
      %p386 = por %p384, %p385
      %p387 = scmp.ne.s32.totalorder %s376, %s377
      %p388 = scmp.eq.s32.totalorder %s38, 0
      %p389 = por %p387, %p388
      %p390 = scmp.ne.s32.totalorder %s376, %s377
      %p391 = scmp.eq.s32.totalorder %s39, 3
      %p392 = por %p390, %p391
      %p394 = scmp.ne.s32.totalorder %s377, %s393
      %p395 = scmp.eq.s32.totalorder %s39, 0
      %p396 = por %p394, %p395
      %p397 = scmp.le.s32.totalorder 1, %s33
      %p398 = scmp.lt.s32.totalorder %s33, 5
      %p399 = pnand %p397, %p398
      %p400 = pneg %p399
      // Predicated region
      $region9: #{tpu_custom_call.1} parent=5 // pred_check
        _
      $region10: #{tpu_custom_call.1} parent=5 // pred_check_branch
        %402 = sbr.rel (%p399) target = $region12
      $region11: #{tpu_custom_call.1} parent=5 // pred_region
        %s403 = ssub.s32 %s33, 1
        // Predicated region
        $region13: #{tpu_custom_call.1} parent=11 // pred_check
          %p404 = pneg %p106
        $region14: #{tpu_custom_call.1} parent=11 // pred_check_branch
          %406 = sbr.rel (%p404) target = $region16
        $region15: #{tpu_custom_call.1} parent=11 // pred_region
          %s408 = ssub.s32 14336, 14336
          %409 = vsyncadd [#allocation6], %s408
          %s410 = sshll.u32 [#allocation5], 4
          %s411 = int_to_ptr.vmem [resolvable:$true] %s410
          %416 = dma.hbm_to_vmem [thread:$0]  %s2, 14336, %s411, [#allocation6], 128, 128, 8
        $region16: #{tpu_custom_call.1} parent=11 // pred_fallthru
          _
        // Predicated region
        $region17: #{tpu_custom_call.1} parent=11 // pred_check
          %p417 = pneg %p127
        $region18: #{tpu_custom_call.1} parent=11 // pred_check_branch
          %419 = sbr.rel (%p417) target = $region20
        $region19: #{tpu_custom_call.1} parent=11 // pred_region
          _
        $region20: #{tpu_custom_call.1} parent=11 // pred_fallthru
          _
        // Predicated region
        $region21: #{tpu_custom_call.1} parent=11 // pred_check
          %p420 = pneg %p148
        $region22: #{tpu_custom_call.1} parent=11 // pred_check_branch
          %422 = sbr.rel (%p420) target = $region24
        $region23: #{tpu_custom_call.1} parent=11 // pred_region
          %s424 = ssub.s32 2048, 2048
          %425 = vsyncadd [#allocation6], %s424
          %s426 = sshll.u32 [#allocation7], 4
          %s427 = int_to_ptr.vmem [resolvable:$true] %s426
          %432 = dma.hbm_to_vmem [thread:$0]  %s4, 2048, %s427, [#allocation6], 64, 64, 4
        $region24: #{tpu_custom_call.1} parent=11 // pred_fallthru
          _
        // Predicated region
        $region25: #{tpu_custom_call.1} parent=11 // pred_check
          %p433 = pneg %p169
        $region26: #{tpu_custom_call.1} parent=11 // pred_check_branch
          %435 = sbr.rel (%p433) target = $region28
        $region27: #{tpu_custom_call.1} parent=11 // pred_region
          _
        $region28: #{tpu_custom_call.1} parent=11 // pred_fallthru
          _
        // Predicated region
        $region29: #{tpu_custom_call.1} parent=11 // pred_check
          %p436 = pneg %p190
        $region30: #{tpu_custom_call.1} parent=11 // pred_check_branch
          %438 = sbr.rel (%p436) target = $region32
        $region31: #{tpu_custom_call.1} parent=11 // pred_region
          _
        $region32: #{tpu_custom_call.1} parent=11 // pred_fallthru
          _
        // Predicated region
        $region33: #{tpu_custom_call.1} parent=11 // pred_check
          %p439 = pneg %p211
        $region34: #{tpu_custom_call.1} parent=11 // pred_check_branch
          %441 = sbr.rel (%p439) target = $region36
        $region35: #{tpu_custom_call.1} parent=11 // pred_region
          _
        $region36: #{tpu_custom_call.1} parent=11 // pred_fallthru
          _
        // Predicated region
        $region37: #{tpu_custom_call.1} parent=11 // pred_check
          %p442 = pneg %p232
        $region38: #{tpu_custom_call.1} parent=11 // pred_check_branch
          %444 = sbr.rel (%p442) target = $region40
        $region39: #{tpu_custom_call.1} parent=11 // pred_region
          _
        $region40: #{tpu_custom_call.1} parent=11 // pred_fallthru
          _
        // Predicated region
        $region41: #{tpu_custom_call.1} parent=11 // pred_check
          %p445 = pneg %p253
        $region42: #{tpu_custom_call.1} parent=11 // pred_check_branch
          %447 = sbr.rel (%p445) target = $region44
        $region43: #{tpu_custom_call.1} parent=11 // pred_region
          _
        $region44: #{tpu_custom_call.1} parent=11 // pred_fallthru
          _
        // Predicated region
        $region45: #{tpu_custom_call.1} parent=11 // pred_check
          %p448 = pneg %p274
        $region46: #{tpu_custom_call.1} parent=11 // pred_check_branch
          %450 = sbr.rel (%p448) target = $region48
        $region47: #{tpu_custom_call.1} parent=11 // pred_region
          %s452 = ssub.s32 2048, 2048
          %453 = vsyncadd [#allocation9], %s452
          %s454 = sshll.u32 [#allocation8], 4
          %s455 = int_to_ptr.vmem [resolvable:$true] %s454
          %460 = dma.hbm_to_vmem [thread:$0]  %s10, 2048, %s455, [#allocation9], 128, 128, 8
        $region48: #{tpu_custom_call.1} parent=11 // pred_fallthru
          _
        // Predicated region
        $region49: #{tpu_custom_call.1} parent=11 // pred_check
          %p461 = pneg %p295
        $region50: #{tpu_custom_call.1} parent=11 // pred_check_branch
          %463 = sbr.rel (%p461) target = $region52
        $region51: #{tpu_custom_call.1} parent=11 // pred_region
          _
        $region52: #{tpu_custom_call.1} parent=11 // pred_fallthru
          _
        // Predicated region
        $region53: #{tpu_custom_call.1} parent=11 // pred_check
          %p464 = pneg %p316
        $region54: #{tpu_custom_call.1} parent=11 // pred_check_branch
          %466 = sbr.rel (%p464) target = $region56
        $region55: #{tpu_custom_call.1} parent=11 // pred_region
          %s468 = ssub.s32 14336, 14336
          %469 = vsyncadd [#allocation9], %s468
          %s470 = sshll.u32 [#allocation10], 4
          %s471 = int_to_ptr.vmem [resolvable:$true] %s470
          %476 = dma.hbm_to_vmem [thread:$0]  %s12, 14336, %s471, [#allocation9], 448, 448, 28
        $region56: #{tpu_custom_call.1} parent=11 // pred_fallthru
          _
        // Predicated region
        $region57: #{tpu_custom_call.1} parent=11 // pred_check
          %p477 = pneg %p337
        $region58: #{tpu_custom_call.1} parent=11 // pred_check_branch
          %479 = sbr.rel (%p477) target = $region60
        $region59: #{tpu_custom_call.1} parent=11 // pred_region
          _
        $region60: #{tpu_custom_call.1} parent=11 // pred_fallthru
          _
      $region12: #{tpu_custom_call.1} parent=5 // pred_fallthru
        _
      %p480 = scmp.lt.s32.totalorder %s33, 4
      // Predicated region
      $region61: #{tpu_custom_call.1} parent=5 // pred_check
        %p481 = pneg %p480
      $region62: #{tpu_custom_call.1} parent=5 // pred_check_branch
        %483 = sbr.rel (%p481) target = $region64
      $region63: #{tpu_custom_call.1} parent=5 // pred_region
        // Predicated region
        $region65: #{tpu_custom_call.1} parent=63 // pred_check
          %p484 = pneg %p53
        $region66: #{tpu_custom_call.1} parent=63 // pred_check_branch
          %486 = sbr.rel (%p484) target = $region68
        $region67: #{tpu_custom_call.1} parent=63 // pred_region
          %s487 = sand.u32 %s43, 1
          %s488 = scalar_lea.sflag [#allocation3], %s487
          %s489 = sand.u32 %s43, 1
          %s490 = smul.addr %s489, 56
          %s491 = scalar_lea.vmem [#allocation2], %s490
          %s492 = smul.u32 2, %s33
          %s494 = ssub.s32 896, 896
          %495 = vsyncadd %s488, %s494
          %s496 = smul.addr %s492, 7
          %s497 = smul.addr %s496, 64
          %s498 = scalar_lea.hbm %s0, %s497
          %s499 = sshll.u32 %s491, 4
          %s500 = int_to_ptr.vmem [resolvable:$true] %s499
          %505 = dma.hbm_to_vmem [thread:$0]  %s498, 896, %s500, %s488, 448, 448, 28
        $region68: #{tpu_custom_call.1} parent=63 // pred_fallthru
          _
        // Predicated region
        $region69: #{tpu_custom_call.1} parent=63 // pred_check
          %p506 = pneg %p79
        $region70: #{tpu_custom_call.1} parent=63 // pred_check_branch
          %508 = sbr.rel (%p506) target = $region72
        $region71: #{tpu_custom_call.1} parent=63 // pred_region
          %s509 = smul.u32 2, %s33
          %p510 = scmp.lt.s32.totalorder %s509, 7
          %s511 = scalar_select %p510, %s509, 7
          %s512 = smul.addr %s511, 8
          %s513 = scalar_lea.vmem %s1, %s512
          %s514 = smul.u32 2, %s33
        $region72: #{tpu_custom_call.1} parent=63 // pred_fallthru
          _
      $region64: #{tpu_custom_call.1} parent=5 // pred_fallthru
        _
      %p515 = scmp.le.s32.totalorder 1, %s33
      %p516 = scmp.lt.s32.totalorder %s33, 5
      %p517 = pnand %p515, %p516
      %p518 = pneg %p517
      // Predicated region
      $region73: #{tpu_custom_call.1} parent=5 // pred_check
        _
      $region74: #{tpu_custom_call.1} parent=5 // pred_check_branch
        %520 = sbr.rel (%p517) target = $region76
      $region75: #{tpu_custom_call.1} parent=5 // pred_region
        %s521 = ssub.s32 %s33, 1
        %s522 = sand.u32 %s46, 1
        %s523 = scalar_lea.sflag [#allocation3], %s522
        %s524 = sand.u32 %s46, 1
        %s525 = smul.addr %s524, 56
        %s526 = scalar_lea.vmem [#allocation2], %s525
        // Predicated region
        $region77: #{tpu_custom_call.1} parent=75 // pred_check
          %p527 = pneg %p59
        $region78: #{tpu_custom_call.1} parent=75 // pred_check_branch
          %529 = sbr.rel (%p527) target = $region80
        $region79: #{tpu_custom_call.1} parent=75 // pred_region
          %530 = dma.done %s523, 896
        $region80: #{tpu_custom_call.1} parent=75 // pred_fallthru
          _
        // Predicated region
        $region81: #{tpu_custom_call.1} parent=75 // pred_check
          %p531 = pneg %p106
        $region82: #{tpu_custom_call.1} parent=75 // pred_check_branch
          %533 = sbr.rel (%p531) target = $region84
        $region83: #{tpu_custom_call.1} parent=75 // pred_region
          %534 = dma.done [#allocation6], 14336
        $region84: #{tpu_custom_call.1} parent=75 // pred_fallthru
          _
        // Predicated region
        $region85: #{tpu_custom_call.1} parent=75 // pred_check
          %p535 = pneg %p148
        $region86: #{tpu_custom_call.1} parent=75 // pred_check_branch
          %537 = sbr.rel (%p535) target = $region88
        $region87: #{tpu_custom_call.1} parent=75 // pred_region
          %538 = dma.done [#allocation6], 2048
        $region88: #{tpu_custom_call.1} parent=75 // pred_fallthru
          _
        // Predicated region
        $region89: #{tpu_custom_call.1} parent=75 // pred_check
          %p539 = pneg %p274
        $region90: #{tpu_custom_call.1} parent=75 // pred_check_branch
          %541 = sbr.rel (%p539) target = $region92
        $region91: #{tpu_custom_call.1} parent=75 // pred_region
          %542 = dma.done [#allocation9], 2048
        $region92: #{tpu_custom_call.1} parent=75 // pred_fallthru
          _
        // Predicated region
        $region93: #{tpu_custom_call.1} parent=75 // pred_check
          %p543 = pneg %p316
        $region94: #{tpu_custom_call.1} parent=75 // pred_check_branch
          %545 = sbr.rel (%p543) target = $region96
        $region95: #{tpu_custom_call.1} parent=75 // pred_region
          %546 = dma.done [#allocation9], 14336
        $region96: #{tpu_custom_call.1} parent=75 // pred_fallthru
          _
        %s547 = sand.u32 %s46, 1
        %s548 = scalar_lea.sflag [#allocation3], %s547
        %s549 = sand.u32 %s46, 1
        %s550 = smul.addr %s549, 56
        %s551 = scalar_lea.vmem [#allocation2], %s550
        %p552 = pneg %p59
        %p553 = pneg %p56
        %s554 = smul.u32 2, %s38
        %p555 = scmp.lt.s32.totalorder %s554, 7
        %s556 = scalar_select %p555, %s554, 7
        %s557 = smul.addr %s556, 8
        %s558 = scalar_lea.vmem %s1, %s557
        %p559 = pneg %p85
        %p560 = pneg %p82
        %p561 = pneg %p106
        %p562 = pneg %p103
        %p563 = pneg %p127
        %p564 = pneg %p124
        %p565 = pneg %p148
        %p566 = pneg %p145
        %p567 = pneg %p169
        %p568 = pneg %p166
        %p569 = pneg %p190
        %p570 = pneg %p187
        %p571 = pneg %p211
        %p572 = pneg %p208
        %p573 = pneg %p232
        %p574 = pneg %p229
        %p575 = pneg %p253
        %p576 = pneg %p250
        %p577 = pneg %p274
        %p578 = pneg %p271
        %p579 = pneg %p295
        %p580 = pneg %p292
        %p581 = pneg %p316
        %p582 = pneg %p313
        %p583 = pneg %p337
        %p584 = pneg %p334
        %p585 = pneg %p363
        %p586 = pneg %p360
        %s587 = sand.u32 %s350, 1
        %s588 = scalar_lea.sflag [#allocation4], %s587
        %s589 = sand.u32 %s350, 1
        %s590 = smul.addr %s589, 56
        %s591 = scalar_lea.vmem [#allocation11], %s590
        %p592 = pneg %p389
        %p593 = pneg %p386
        %s594 = sand.u32 %s376, 1
        %s595 = scalar_lea.sflag [#allocation13], %s594
        %s596 = sand.u32 %s376, 1
        %s597 = smul.addr %s596, 16
        %s598 = scalar_lea.vmem [#allocation12], %s597
        %s599 = smul.u32 2, %s38
        %s600 = smul.u32 2, %s38
        %p601 = scmp.lt.s32.totalorder %s600, 7
        %s602 = scalar_select %p601, %s600, 7
        %s603 = smul.addr %s602, 8
        %s604 = scalar_lea.vmem %s1, %s603
        %s605 = smul.u32 2, %s38
        %s606 = smul.u32 2, %s38
        %s607 = smul.u32 2, %s38
        %v611 = vld [vmem:[%s526] sm:$0xff]
        %v612 = vld [vmem:[%s526 + $0x8] sm:$0xff]
        %v613 = vld [vmem:[%s526 + $0x10] sm:$0xff]
        %v614 = vld [vmem:[%s526 + $0x18] sm:$0xf]
        %v615 = vld [vmem:[%s526 + $0x1c] sm:$0xff]
        %v616 = vld [vmem:[%s526 + $0x24] sm:$0xff]
        %v617 = vld [vmem:[%s526 + $0x2c] sm:$0xff]
        %v618 = vld [vmem:[%s526 + $0x34] sm:$0xf]
        %v619 = vld [vmem:[#allocation5] sm:$0xff]
        %v620 = vld [vmem:[#allocation5 + $0x8] sm:$0xff]
        %v621 = vld [vmem:[#allocation5 + $0x10] sm:$0xff]
        %v622 = vld [vmem:[#allocation5 + $0x18] sm:$0xff]
        %v623 = vld [vmem:[#allocation5 + $0x20] sm:$0xff]
        %v624 = vld [vmem:[#allocation5 + $0x28] sm:$0xff]
        %v625 = vld [vmem:[#allocation5 + $0x30] sm:$0xff]
        %v626 = vld [vmem:[#allocation5 + $0x38] sm:$0xff]
        %v627 = vld [vmem:[#allocation5 + $0x40] sm:$0xff]
        %v628 = vld [vmem:[#allocation5 + $0x48] sm:$0xff]
        %v629 = vld [vmem:[#allocation5 + $0x50] sm:$0xff]
        %v630 = vld [vmem:[#allocation5 + $0x58] sm:$0xff]
        %v631 = vld [vmem:[#allocation5 + $0x60] sm:$0xff]
        %v632 = vld [vmem:[#allocation5 + $0x68] sm:$0xff]
        %v633 = vld [vmem:[#allocation5 + $0x70] sm:$0xff]
        %v634 = vld [vmem:[#allocation5 + $0x78] sm:$0xff]
        %v635 = vld [vmem:[#allocation5 + $0x80] sm:$0xff]
        %v636 = vld [vmem:[#allocation5 + $0x88] sm:$0xff]
        %v637 = vld [vmem:[#allocation5 + $0x90] sm:$0xff]
        %v638 = vld [vmem:[#allocation5 + $0x98] sm:$0xff]
        %v639 = vld [vmem:[#allocation5 + $0xa0] sm:$0xff]
        %v640 = vld [vmem:[#allocation5 + $0xa8] sm:$0xff]
        %v641 = vld [vmem:[#allocation5 + $0xb0] sm:$0xff]
        %v642 = vld [vmem:[#allocation5 + $0xb8] sm:$0xff]
        %v643 = vld [vmem:[#allocation5 + $0xc0] sm:$0xff]
        %v644 = vld [vmem:[#allocation5 + $0xc8] sm:$0xff]
        %v645 = vld [vmem:[#allocation5 + $0xd0] sm:$0xff]
        %v646 = vld [vmem:[#allocation5 + $0xd8] sm:$0xff]
        %v647 = vld [vmem:[#allocation5 + $0xe0] sm:$0xff]
        %v648 = vld [vmem:[#allocation5 + $0xe8] sm:$0xff]
        %v649 = vld [vmem:[#allocation5 + $0xf0] sm:$0xff]
        %v650 = vld [vmem:[#allocation5 + $0xf8] sm:$0xff]
        %v651 = vld [vmem:[#allocation5 + $0x100] sm:$0xff]
        %v652 = vld [vmem:[#allocation5 + $0x108] sm:$0xff]
        %v653 = vld [vmem:[#allocation5 + $0x110] sm:$0xff]
        %v654 = vld [vmem:[#allocation5 + $0x118] sm:$0xff]
        %v655 = vld [vmem:[#allocation5 + $0x120] sm:$0xff]
        %v656 = vld [vmem:[#allocation5 + $0x128] sm:$0xff]
        %v657 = vld [vmem:[#allocation5 + $0x130] sm:$0xff]
        %v658 = vld [vmem:[#allocation5 + $0x138] sm:$0xff]
        %v659 = vld [vmem:[#allocation5 + $0x140] sm:$0xff]
        %v660 = vld [vmem:[#allocation5 + $0x148] sm:$0xff]
        %v661 = vld [vmem:[#allocation5 + $0x150] sm:$0xff]
        %v662 = vld [vmem:[#allocation5 + $0x158] sm:$0xff]
        %v663 = vld [vmem:[#allocation5 + $0x160] sm:$0xff]
        %v664 = vld [vmem:[#allocation5 + $0x168] sm:$0xff]
        %v665 = vld [vmem:[#allocation5 + $0x170] sm:$0xff]
        %v666 = vld [vmem:[#allocation5 + $0x178] sm:$0xff]
        %v667 = vld [vmem:[#allocation5 + $0x180] sm:$0xff]
        %v668 = vld [vmem:[#allocation5 + $0x188] sm:$0xff]
        %v669 = vld [vmem:[#allocation5 + $0x190] sm:$0xff]
        %v670 = vld [vmem:[#allocation5 + $0x198] sm:$0xff]
        %v671 = vld [vmem:[#allocation5 + $0x1a0] sm:$0xff]
        %v672 = vld [vmem:[#allocation5 + $0x1a8] sm:$0xff]
        %v673 = vld [vmem:[#allocation5 + $0x1b0] sm:$0xff]
        %v674 = vld [vmem:[#allocation5 + $0x1b8] sm:$0xff]
        %v675 = vld [vmem:[#allocation5 + $0x1c0] sm:$0xff]
        %v676 = vld [vmem:[#allocation5 + $0x1c8] sm:$0xff]
        %v677 = vld [vmem:[#allocation5 + $0x1d0] sm:$0xff]
        %v678 = vld [vmem:[#allocation5 + $0x1d8] sm:$0xff]
        %v679 = vld [vmem:[#allocation5 + $0x1e0] sm:$0xff]
        %v680 = vld [vmem:[#allocation5 + $0x1e8] sm:$0xff]
        %v681 = vld [vmem:[#allocation5 + $0x1f0] sm:$0xff]
        %v682 = vld [vmem:[#allocation5 + $0x1f8] sm:$0xff]
        %v683 = vld [vmem:[#allocation5 + $0x200] sm:$0xff]
        %v684 = vld [vmem:[#allocation5 + $0x208] sm:$0xff]
        %v685 = vld [vmem:[#allocation5 + $0x210] sm:$0xff]
        %v686 = vld [vmem:[#allocation5 + $0x218] sm:$0xff]
        %v687 = vld [vmem:[#allocation5 + $0x220] sm:$0xff]
        %v688 = vld [vmem:[#allocation5 + $0x228] sm:$0xff]
        %v689 = vld [vmem:[#allocation5 + $0x230] sm:$0xff]
        %v690 = vld [vmem:[#allocation5 + $0x238] sm:$0xff]
        %v691 = vld [vmem:[#allocation5 + $0x240] sm:$0xff]
        %v692 = vld [vmem:[#allocation5 + $0x248] sm:$0xff]
        %v693 = vld [vmem:[#allocation5 + $0x250] sm:$0xff]
        %v694 = vld [vmem:[#allocation5 + $0x258] sm:$0xff]
        %v695 = vld [vmem:[#allocation5 + $0x260] sm:$0xff]
        %v696 = vld [vmem:[#allocation5 + $0x268] sm:$0xff]
        %v697 = vld [vmem:[#allocation5 + $0x270] sm:$0xff]
        %v698 = vld [vmem:[#allocation5 + $0x278] sm:$0xff]
        %v699 = vld [vmem:[#allocation5 + $0x280] sm:$0xff]
        %v700 = vld [vmem:[#allocation5 + $0x288] sm:$0xff]
        %v701 = vld [vmem:[#allocation5 + $0x290] sm:$0xff]
        %v702 = vld [vmem:[#allocation5 + $0x298] sm:$0xff]
        %v703 = vld [vmem:[#allocation5 + $0x2a0] sm:$0xff]
        %v704 = vld [vmem:[#allocation5 + $0x2a8] sm:$0xff]
        %v705 = vld [vmem:[#allocation5 + $0x2b0] sm:$0xff]
        %v706 = vld [vmem:[#allocation5 + $0x2b8] sm:$0xff]
        %v707 = vld [vmem:[#allocation5 + $0x2c0] sm:$0xff]
        %v708 = vld [vmem:[#allocation5 + $0x2c8] sm:$0xff]
        %v709 = vld [vmem:[#allocation5 + $0x2d0] sm:$0xff]
        %v710 = vld [vmem:[#allocation5 + $0x2d8] sm:$0xff]
        %v711 = vld [vmem:[#allocation5 + $0x2e0] sm:$0xff]
        %v712 = vld [vmem:[#allocation5 + $0x2e8] sm:$0xff]
        %v713 = vld [vmem:[#allocation5 + $0x2f0] sm:$0xff]
        %v714 = vld [vmem:[#allocation5 + $0x2f8] sm:$0xff]
        %v715 = vld [vmem:[#allocation5 + $0x300] sm:$0xff]
        %v716 = vld [vmem:[#allocation5 + $0x308] sm:$0xff]
        %v717 = vld [vmem:[#allocation5 + $0x310] sm:$0xff]
        %v718 = vld [vmem:[#allocation5 + $0x318] sm:$0xff]
        %v719 = vld [vmem:[#allocation5 + $0x320] sm:$0xff]
        %v720 = vld [vmem:[#allocation5 + $0x328] sm:$0xff]
        %v721 = vld [vmem:[#allocation5 + $0x330] sm:$0xff]
        %v722 = vld [vmem:[#allocation5 + $0x338] sm:$0xff]
        %v723 = vld [vmem:[#allocation5 + $0x340] sm:$0xff]
        %v724 = vld [vmem:[#allocation5 + $0x348] sm:$0xff]
        %v725 = vld [vmem:[#allocation5 + $0x350] sm:$0xff]
        %v726 = vld [vmem:[#allocation5 + $0x358] sm:$0xff]
        %v727 = vld [vmem:[#allocation5 + $0x360] sm:$0xff]
        %v728 = vld [vmem:[#allocation5 + $0x368] sm:$0xff]
        %v729 = vld [vmem:[#allocation5 + $0x370] sm:$0xff]
        %v730 = vld [vmem:[#allocation5 + $0x378] sm:$0xff]
        %v731 = vld [vmem:[%s3] sm:$0x3]
        %v733 = vlaneseq
        %v734 = vshrl.u32 %v733, 7
        %v735 = vsub.s32 0, %v734
        %v736 = vrot.slane %v731, %v735
        %v737 = vlaneseq
        %v738 = vshrl.u32 %v737, 7
        %v739 = vsub.s32 1, %v738
        %v740 = vrot.slane %v731, %v739
        %v751 = vunpack.c.l.b16 %v611
        %v752 = vunpack.c.h.b16 %v611
        %v753 = vunpack.c.l.b16 %v612
        %v754 = vunpack.c.h.b16 %v612
        %v755 = vunpack.c.l.b16 %v613
        %v756 = vunpack.c.h.b16 %v613
        %v757 = vunpack.c.l.b16 %v614
        %v758 = vunpack.c.l.b16 %v615
        %v759 = vunpack.c.h.b16 %v615
        %v760 = vunpack.c.l.b16 %v616
        %v761 = vunpack.c.h.b16 %v616
        %v762 = vunpack.c.l.b16 %v617
        %v763 = vunpack.c.h.b16 %v617
        %v764 = vunpack.c.l.b16 %v618
        %v765 = vpack.c.b16 %v758, %v751
        %v766 = vpack.c.b16 %v759, %v752
        %v767 = vpack.c.b16 %v760, %v753
        %v768 = vpack.c.b16 %v761, %v754
        %v769 = vpack.c.b16 %v762, %v755
        %v770 = vpack.c.b16 %v763, %v756
        %v771 = vpack.c.b16 %v764, %v757
        %v891 = vunpack.c.l.b16 %v619
        %v892 = vunpack.c.h.b16 %v619
        %v893 = vunpack.c.l.b16 %v620
        %v894 = vunpack.c.h.b16 %v620
        %v895 = vunpack.c.l.b16 %v621
        %v896 = vunpack.c.h.b16 %v621
        %v897 = vunpack.c.l.b16 %v622
        %v898 = vunpack.c.h.b16 %v622
        %v899 = vunpack.c.l.b16 %v623
        %v900 = vunpack.c.h.b16 %v623
        %v901 = vunpack.c.l.b16 %v624
        %v902 = vunpack.c.h.b16 %v624
        %v903 = vunpack.c.l.b16 %v625
        %v904 = vunpack.c.h.b16 %v625
        %v905 = vunpack.c.l.b16 %v626
        %v906 = vunpack.c.h.b16 %v626
        %v907 = vunpack.c.l.b16 %v627
        %v908 = vunpack.c.h.b16 %v627
        %v909 = vunpack.c.l.b16 %v628
        %v910 = vunpack.c.h.b16 %v628
        %v911 = vunpack.c.l.b16 %v629
        %v912 = vunpack.c.h.b16 %v629
        %v913 = vunpack.c.l.b16 %v630
        %v914 = vunpack.c.h.b16 %v630
        %v915 = vunpack.c.l.b16 %v631
        %v916 = vunpack.c.h.b16 %v631
        %v917 = vunpack.c.l.b16 %v632
        %v918 = vunpack.c.h.b16 %v632
        %v919 = vunpack.c.l.b16 %v633
        %v920 = vunpack.c.h.b16 %v633
        %v921 = vunpack.c.l.b16 %v634
        %v922 = vunpack.c.h.b16 %v634
        %v923 = vunpack.c.l.b16 %v635
        %v924 = vunpack.c.h.b16 %v635
        %v925 = vunpack.c.l.b16 %v636
        %v926 = vunpack.c.h.b16 %v636
        %v927 = vunpack.c.l.b16 %v637
        %v928 = vunpack.c.h.b16 %v637
        %v929 = vunpack.c.l.b16 %v638
        %v930 = vunpack.c.h.b16 %v638
        %v931 = vunpack.c.l.b16 %v639
        %v932 = vunpack.c.h.b16 %v639
        %v933 = vunpack.c.l.b16 %v640
        %v934 = vunpack.c.h.b16 %v640
        %v935 = vunpack.c.l.b16 %v641
        %v936 = vunpack.c.h.b16 %v641
        %v937 = vunpack.c.l.b16 %v642
        %v938 = vunpack.c.h.b16 %v642
        %v939 = vunpack.c.l.b16 %v643
        %v940 = vunpack.c.h.b16 %v643
        %v941 = vunpack.c.l.b16 %v644
        %v942 = vunpack.c.h.b16 %v644
        %v943 = vunpack.c.l.b16 %v645
        %v944 = vunpack.c.h.b16 %v645
        %v945 = vunpack.c.l.b16 %v646
        %v946 = vunpack.c.h.b16 %v646
        %v947 = vunpack.c.l.b16 %v647
        %v948 = vunpack.c.h.b16 %v647
        %v949 = vunpack.c.l.b16 %v648
        %v950 = vunpack.c.h.b16 %v648
        %v951 = vunpack.c.l.b16 %v649
        %v952 = vunpack.c.h.b16 %v649
        %v953 = vunpack.c.l.b16 %v650
        %v954 = vunpack.c.h.b16 %v650
        %v955 = vunpack.c.l.b16 %v651
        %v956 = vunpack.c.h.b16 %v651
        %v957 = vunpack.c.l.b16 %v652
        %v958 = vunpack.c.h.b16 %v652
        %v959 = vunpack.c.l.b16 %v653
        %v960 = vunpack.c.h.b16 %v653
        %v961 = vunpack.c.l.b16 %v654
        %v962 = vunpack.c.h.b16 %v654
        %v963 = vunpack.c.l.b16 %v655
        %v964 = vunpack.c.h.b16 %v655
        %v965 = vunpack.c.l.b16 %v656
        %v966 = vunpack.c.h.b16 %v656
        %v967 = vunpack.c.l.b16 %v657
        %v968 = vunpack.c.h.b16 %v657
        %v969 = vunpack.c.l.b16 %v658
        %v970 = vunpack.c.h.b16 %v658
        %v971 = vunpack.c.l.b16 %v659
        %v972 = vunpack.c.h.b16 %v659
        %v973 = vunpack.c.l.b16 %v660
        %v974 = vunpack.c.h.b16 %v660
        %v975 = vunpack.c.l.b16 %v661
        %v976 = vunpack.c.h.b16 %v661
        %v977 = vunpack.c.l.b16 %v662
        %v978 = vunpack.c.h.b16 %v662
        %v979 = vunpack.c.l.b16 %v663
        %v980 = vunpack.c.h.b16 %v663
        %v981 = vunpack.c.l.b16 %v664
        %v982 = vunpack.c.h.b16 %v664
        %v983 = vunpack.c.l.b16 %v665
        %v984 = vunpack.c.h.b16 %v665
        %v985 = vunpack.c.l.b16 %v666
        %v986 = vunpack.c.h.b16 %v666
        %v987 = vunpack.c.l.b16 %v667
        %v988 = vunpack.c.h.b16 %v667
        %v989 = vunpack.c.l.b16 %v668
        %v990 = vunpack.c.h.b16 %v668
        %v991 = vunpack.c.l.b16 %v669
        %v992 = vunpack.c.h.b16 %v669
        %v993 = vunpack.c.l.b16 %v670
        %v994 = vunpack.c.h.b16 %v670
        %v995 = vunpack.c.l.b16 %v671
        %v996 = vunpack.c.h.b16 %v671
        %v997 = vunpack.c.l.b16 %v672
        %v998 = vunpack.c.h.b16 %v672
        %v999 = vunpack.c.l.b16 %v673
        %v1000 = vunpack.c.h.b16 %v673
        %v1001 = vunpack.c.l.b16 %v674
        %v1002 = vunpack.c.h.b16 %v674
        %v1003 = vunpack.c.l.b16 %v675
        %v1004 = vunpack.c.h.b16 %v675
        %v1005 = vunpack.c.l.b16 %v676
        %v1006 = vunpack.c.h.b16 %v676
        %v1007 = vunpack.c.l.b16 %v677
        %v1008 = vunpack.c.h.b16 %v677
        %v1009 = vunpack.c.l.b16 %v678
        %v1010 = vunpack.c.h.b16 %v678
        %v1011 = vunpack.c.l.b16 %v679
        %v1012 = vunpack.c.h.b16 %v679
        %v1013 = vunpack.c.l.b16 %v680
        %v1014 = vunpack.c.h.b16 %v680
        %v1015 = vunpack.c.l.b16 %v681
        %v1016 = vunpack.c.h.b16 %v681
        %v1017 = vunpack.c.l.b16 %v682
        %v1018 = vunpack.c.h.b16 %v682
        %v1019 = vunpack.c.l.b16 %v683
        %v1020 = vunpack.c.h.b16 %v683
        %v1021 = vunpack.c.l.b16 %v684
        %v1022 = vunpack.c.h.b16 %v684
        %v1023 = vunpack.c.l.b16 %v685
        %v1024 = vunpack.c.h.b16 %v685
        %v1025 = vunpack.c.l.b16 %v686
        %v1026 = vunpack.c.h.b16 %v686
        %v1027 = vunpack.c.l.b16 %v687
        %v1028 = vunpack.c.h.b16 %v687
        %v1029 = vunpack.c.l.b16 %v688
        %v1030 = vunpack.c.h.b16 %v688
        %v1031 = vunpack.c.l.b16 %v689
        %v1032 = vunpack.c.h.b16 %v689
        %v1033 = vunpack.c.l.b16 %v690
        %v1034 = vunpack.c.h.b16 %v690
        %v1035 = vunpack.c.l.b16 %v691
        %v1036 = vunpack.c.h.b16 %v691
        %v1037 = vunpack.c.l.b16 %v692
        %v1038 = vunpack.c.h.b16 %v692
        %v1039 = vunpack.c.l.b16 %v693
        %v1040 = vunpack.c.h.b16 %v693
        %v1041 = vunpack.c.l.b16 %v694
        %v1042 = vunpack.c.h.b16 %v694
        %v1043 = vunpack.c.l.b16 %v695
        %v1044 = vunpack.c.h.b16 %v695
        %v1045 = vunpack.c.l.b16 %v696
        %v1046 = vunpack.c.h.b16 %v696
        %v1047 = vunpack.c.l.b16 %v697
        %v1048 = vunpack.c.h.b16 %v697
        %v1049 = vunpack.c.l.b16 %v698
        %v1050 = vunpack.c.h.b16 %v698
        %v1051 = vunpack.c.l.b16 %v699
        %v1052 = vunpack.c.h.b16 %v699
        %v1053 = vunpack.c.l.b16 %v700
        %v1054 = vunpack.c.h.b16 %v700
        %v1055 = vunpack.c.l.b16 %v701
        %v1056 = vunpack.c.h.b16 %v701
        %v1057 = vunpack.c.l.b16 %v702
        %v1058 = vunpack.c.h.b16 %v702
        %v1059 = vunpack.c.l.b16 %v703
        %v1060 = vunpack.c.h.b16 %v703
        %v1061 = vunpack.c.l.b16 %v704
        %v1062 = vunpack.c.h.b16 %v704
        %v1063 = vunpack.c.l.b16 %v705
        %v1064 = vunpack.c.h.b16 %v705
        %v1065 = vunpack.c.l.b16 %v706
        %v1066 = vunpack.c.h.b16 %v706
        %v1067 = vunpack.c.l.b16 %v707
        %v1068 = vunpack.c.h.b16 %v707
        %v1069 = vunpack.c.l.b16 %v708
        %v1070 = vunpack.c.h.b16 %v708
        %v1071 = vunpack.c.l.b16 %v709
        %v1072 = vunpack.c.h.b16 %v709
        %v1073 = vunpack.c.l.b16 %v710
        %v1074 = vunpack.c.h.b16 %v710
        %v1075 = vunpack.c.l.b16 %v711
        %v1076 = vunpack.c.h.b16 %v711
        %v1077 = vunpack.c.l.b16 %v712
        %v1078 = vunpack.c.h.b16 %v712
        %v1079 = vunpack.c.l.b16 %v713
        %v1080 = vunpack.c.h.b16 %v713
        %v1081 = vunpack.c.l.b16 %v714
        %v1082 = vunpack.c.h.b16 %v714
        %v1083 = vunpack.c.l.b16 %v715
        %v1084 = vunpack.c.h.b16 %v715
        %v1085 = vunpack.c.l.b16 %v716
        %v1086 = vunpack.c.h.b16 %v716
        %v1087 = vunpack.c.l.b16 %v717
        %v1088 = vunpack.c.h.b16 %v717
        %v1089 = vunpack.c.l.b16 %v718
        %v1090 = vunpack.c.h.b16 %v718
        %v1091 = vunpack.c.l.b16 %v719
        %v1092 = vunpack.c.h.b16 %v719
        %v1093 = vunpack.c.l.b16 %v720
        %v1094 = vunpack.c.h.b16 %v720
        %v1095 = vunpack.c.l.b16 %v721
        %v1096 = vunpack.c.h.b16 %v721
        %v1097 = vunpack.c.l.b16 %v722
        %v1098 = vunpack.c.h.b16 %v722
        %v1099 = vunpack.c.l.b16 %v723
        %v1100 = vunpack.c.h.b16 %v723
        %v1101 = vunpack.c.l.b16 %v724
        %v1102 = vunpack.c.h.b16 %v724
        %v1103 = vunpack.c.l.b16 %v725
        %v1104 = vunpack.c.h.b16 %v725
        %v1105 = vunpack.c.l.b16 %v726
        %v1106 = vunpack.c.h.b16 %v726
        %v1107 = vunpack.c.l.b16 %v727
        %v1108 = vunpack.c.h.b16 %v727
        %v1109 = vunpack.c.l.b16 %v728
        %v1110 = vunpack.c.h.b16 %v728
        %v1111 = vunpack.c.l.b16 %v729
        %v1112 = vunpack.c.h.b16 %v729
        %v1113 = vunpack.c.l.b16 %v730
        %v1114 = vunpack.c.h.b16 %v730
        %v1115 = vpack.c.b16 %v893, %v891
        %v1116 = vpack.c.b16 %v894, %v892
        %v1117 = vpack.c.b16 %v897, %v895
        %v1118 = vpack.c.b16 %v898, %v896
        %v1119 = vpack.c.b16 %v901, %v899
        %v1120 = vpack.c.b16 %v902, %v900
        %v1121 = vpack.c.b16 %v905, %v903
        %v1122 = vpack.c.b16 %v906, %v904
        %v1123 = vpack.c.b16 %v909, %v907
        %v1124 = vpack.c.b16 %v910, %v908
        %v1125 = vpack.c.b16 %v913, %v911
        %v1126 = vpack.c.b16 %v914, %v912
        %v1127 = vpack.c.b16 %v917, %v915
        %v1128 = vpack.c.b16 %v918, %v916
        %v1129 = vpack.c.b16 %v921, %v919
        %v1130 = vpack.c.b16 %v922, %v920
        %v1131 = vpack.c.b16 %v925, %v923
        %v1132 = vpack.c.b16 %v926, %v924
        %v1133 = vpack.c.b16 %v929, %v927
        %v1134 = vpack.c.b16 %v930, %v928
        %v1135 = vpack.c.b16 %v933, %v931
        %v1136 = vpack.c.b16 %v934, %v932
        %v1137 = vpack.c.b16 %v937, %v935
        %v1138 = vpack.c.b16 %v938, %v936
        %v1139 = vpack.c.b16 %v941, %v939
        %v1140 = vpack.c.b16 %v942, %v940
        %v1141 = vpack.c.b16 %v945, %v943
        %v1142 = vpack.c.b16 %v946, %v944
        %v1143 = vpack.c.b16 %v949, %v947
        %v1144 = vpack.c.b16 %v950, %v948
        %v1145 = vpack.c.b16 %v953, %v951
        %v1146 = vpack.c.b16 %v954, %v952
        %v1147 = vpack.c.b16 %v957, %v955
        %v1148 = vpack.c.b16 %v958, %v956
        %v1149 = vpack.c.b16 %v961, %v959
        %v1150 = vpack.c.b16 %v962, %v960
        %v1151 = vpack.c.b16 %v965, %v963
        %v1152 = vpack.c.b16 %v966, %v964
        %v1153 = vpack.c.b16 %v969, %v967
        %v1154 = vpack.c.b16 %v970, %v968
        %v1155 = vpack.c.b16 %v973, %v971
        %v1156 = vpack.c.b16 %v974, %v972
        %v1157 = vpack.c.b16 %v977, %v975
        %v1158 = vpack.c.b16 %v978, %v976
        %v1159 = vpack.c.b16 %v981, %v979
        %v1160 = vpack.c.b16 %v982, %v980
        %v1161 = vpack.c.b16 %v985, %v983
        %v1162 = vpack.c.b16 %v986, %v984
        %v1163 = vpack.c.b16 %v989, %v987
        %v1164 = vpack.c.b16 %v990, %v988
        %v1165 = vpack.c.b16 %v993, %v991
        %v1166 = vpack.c.b16 %v994, %v992
        %v1167 = vpack.c.b16 %v997, %v995
        %v1168 = vpack.c.b16 %v998, %v996
        %v1169 = vpack.c.b16 %v1001, %v999
        %v1170 = vpack.c.b16 %v1002, %v1000
        %v1171 = vpack.c.b16 %v1005, %v1003
        %v1172 = vpack.c.b16 %v1006, %v1004
        %v1173 = vpack.c.b16 %v1009, %v1007
        %v1174 = vpack.c.b16 %v1010, %v1008
        %v1175 = vpack.c.b16 %v1013, %v1011
        %v1176 = vpack.c.b16 %v1014, %v1012
        %v1177 = vpack.c.b16 %v1017, %v1015
        %v1178 = vpack.c.b16 %v1018, %v1016
        %v1179 = vpack.c.b16 %v1021, %v1019
        %v1180 = vpack.c.b16 %v1022, %v1020
        %v1181 = vpack.c.b16 %v1025, %v1023
        %v1182 = vpack.c.b16 %v1026, %v1024
        %v1183 = vpack.c.b16 %v1029, %v1027
        %v1184 = vpack.c.b16 %v1030, %v1028
        %v1185 = vpack.c.b16 %v1033, %v1031
        %v1186 = vpack.c.b16 %v1034, %v1032
        %v1187 = vpack.c.b16 %v1037, %v1035
        %v1188 = vpack.c.b16 %v1038, %v1036
        %v1189 = vpack.c.b16 %v1041, %v1039
        %v1190 = vpack.c.b16 %v1042, %v1040
        %v1191 = vpack.c.b16 %v1045, %v1043
        %v1192 = vpack.c.b16 %v1046, %v1044
        %v1193 = vpack.c.b16 %v1049, %v1047
        %v1194 = vpack.c.b16 %v1050, %v1048
        %v1195 = vpack.c.b16 %v1053, %v1051
        %v1196 = vpack.c.b16 %v1054, %v1052
        %v1197 = vpack.c.b16 %v1057, %v1055
        %v1198 = vpack.c.b16 %v1058, %v1056
        %v1199 = vpack.c.b16 %v1061, %v1059
        %v1200 = vpack.c.b16 %v1062, %v1060
        %v1201 = vpack.c.b16 %v1065, %v1063
        %v1202 = vpack.c.b16 %v1066, %v1064
        %v1203 = vpack.c.b16 %v1069, %v1067
        %v1204 = vpack.c.b16 %v1070, %v1068
        %v1205 = vpack.c.b16 %v1073, %v1071
        %v1206 = vpack.c.b16 %v1074, %v1072
        %v1207 = vpack.c.b16 %v1077, %v1075
        %v1208 = vpack.c.b16 %v1078, %v1076
        %v1209 = vpack.c.b16 %v1081, %v1079
        %v1210 = vpack.c.b16 %v1082, %v1080
        %v1211 = vpack.c.b16 %v1085, %v1083
        %v1212 = vpack.c.b16 %v1086, %v1084
        %v1213 = vpack.c.b16 %v1089, %v1087
        %v1214 = vpack.c.b16 %v1090, %v1088
        %v1215 = vpack.c.b16 %v1093, %v1091
        %v1216 = vpack.c.b16 %v1094, %v1092
        %v1217 = vpack.c.b16 %v1097, %v1095
        %v1218 = vpack.c.b16 %v1098, %v1096
        %v1219 = vpack.c.b16 %v1101, %v1099
        %v1220 = vpack.c.b16 %v1102, %v1100
        %v1221 = vpack.c.b16 %v1105, %v1103
        %v1222 = vpack.c.b16 %v1106, %v1104
        %v1223 = vpack.c.b16 %v1109, %v1107
        %v1224 = vpack.c.b16 %v1110, %v1108
        %v1225 = vpack.c.b16 %v1113, %v1111
        %v1226 = vpack.c.b16 %v1114, %v1112
        %1339 = vmatprep.subr.bf16.mxu0 %v1130
        %1340 = vmatpush1.bf16.msra.mxu0 %v1129
        %1341 = vmatprep.subr.bf16.mxu0 %v1128
        %1342 = vmatpush1.bf16.msra.mxu0 %v1127
        %1343 = vmatprep.subr.bf16.mxu0 %v1126
        %1344 = vmatpush1.bf16.msra.mxu0 %v1125
        %1345 = vmatprep.subr.bf16.mxu0 %v1124
        %1346 = vmatpush1.bf16.msra.mxu0 %v1123
        %1347 = vmatprep.subr.bf16.mxu0 %v1122
        %1348 = vmatpush1.bf16.msra.mxu0 %v1121
        %1349 = vmatprep.subr.bf16.mxu0 %v1120
        %1350 = vmatpush1.bf16.msra.mxu0 %v1119
        %1351 = vmatprep.subr.bf16.mxu0 %v1118
        %1352 = vmatpush1.bf16.msra.mxu0 %v1117
        %1353 = vmatprep.subr.bf16.mxu0 %v1116
        %1354 = vmatpush1.bf16.msra.mxu0 %v1115
        %1355 = vmatprep.subr.bf16.mxu0 %v1146
        %1356 = vmatpush2.bf16.msra.mxu0 %v1145
        %1357 = vmatprep.subr.bf16.mxu0 %v1144
        %1358 = vmatpush2.bf16.msra.mxu0 %v1143
        %1359 = vmatprep.subr.bf16.mxu0 %v1142
        %1360 = vmatpush2.bf16.msra.mxu0 %v1141
        %1361 = vmatprep.subr.bf16.mxu0 %v1140
        %1362 = vmatpush2.bf16.msra.mxu0 %v1139
        %1363 = vmatprep.subr.bf16.mxu0 %v1138
        %1364 = vmatpush2.bf16.msra.mxu0 %v1137
        %1365 = vmatprep.subr.bf16.mxu0 %v1136
        %1366 = vmatpush2.bf16.msra.mxu0 %v1135
        %1367 = vmatprep.subr.bf16.mxu0 %v1134
        %1368 = vmatpush2.bf16.msra.mxu0 %v1133
        %1369 = vmatprep.subr.bf16.mxu0 %v1132
        %1370 = vmatpush2.bf16.msra.mxu0 %v1131
        %1371 = vmatprep.mubr.bf16.mxu0 %v766
        %1372 = vmatmul.mubr.bf16.gmra.mxu0 %v765
        %v1373 = vpop.f32.mrf.mxu0
        %v1374 = vadd.f32 %v736, %v1373
        %v1375 = vpop.f32.mrf.mxu0
        %v1376 = vadd.f32 %v740, %v1375
        %v1377 = vpop.f32.mrf.mxu0
        %v1378 = vadd.f32 %v736, %v1377
        %v1379 = vpop.f32.mrf.mxu0
        %v1380 = vadd.f32 %v740, %v1379
        %1381 = vdwg.mxu0
        %1382 = vmatprep.subr.bf16.mxu0 %v1162
        %1383 = vmatpush1.bf16.msra.mxu0 %v1161
        %1384 = vmatprep.subr.bf16.mxu0 %v1160
        %1385 = vmatpush1.bf16.msra.mxu0 %v1159
        %1386 = vmatprep.subr.bf16.mxu0 %v1158
        %1387 = vmatpush1.bf16.msra.mxu0 %v1157
        %1388 = vmatprep.subr.bf16.mxu0 %v1156
        %1389 = vmatpush1.bf16.msra.mxu0 %v1155
        %1390 = vmatprep.subr.bf16.mxu0 %v1154
        %1391 = vmatpush1.bf16.msra.mxu0 %v1153
        %1392 = vmatprep.subr.bf16.mxu0 %v1152
        %1393 = vmatpush1.bf16.msra.mxu0 %v1151
        %1394 = vmatprep.subr.bf16.mxu0 %v1150
        %1395 = vmatpush1.bf16.msra.mxu0 %v1149
        %1396 = vmatprep.subr.bf16.mxu0 %v1148
        %1397 = vmatpush1.bf16.msra.mxu0 %v1147
        %1398 = vmatprep.subr.bf16.mxu0 %v1178
        %1399 = vmatpush2.bf16.msra.mxu0 %v1177
        %1400 = vmatprep.subr.bf16.mxu0 %v1176
        %1401 = vmatpush2.bf16.msra.mxu0 %v1175
        %1402 = vmatprep.subr.bf16.mxu0 %v1174
        %1403 = vmatpush2.bf16.msra.mxu0 %v1173
        %1404 = vmatprep.subr.bf16.mxu0 %v1172
        %1405 = vmatpush2.bf16.msra.mxu0 %v1171
        %1406 = vmatprep.subr.bf16.mxu0 %v1170
        %1407 = vmatpush2.bf16.msra.mxu0 %v1169
        %1408 = vmatprep.subr.bf16.mxu0 %v1168
        %1409 = vmatpush2.bf16.msra.mxu0 %v1167
        %1410 = vmatprep.subr.bf16.mxu0 %v1166
        %1411 = vmatpush2.bf16.msra.mxu0 %v1165
        %1412 = vmatprep.subr.bf16.mxu0 %v1164
        %1413 = vmatpush2.bf16.msra.mxu0 %v1163
        %1414 = vmatprep.mubr.bf16.mxu0 %v768
        %1415 = vmatmul.mubr.bf16.gmra.mxu0 %v767
        %v1416 = vpop.f32.mrf.mxu0
        %v1417 = vadd.f32 %v1374, %v1416
        %v1418 = vpop.f32.mrf.mxu0
        %v1419 = vadd.f32 %v1376, %v1418
        %v1420 = vpop.f32.mrf.mxu0
        %v1421 = vadd.f32 %v1378, %v1420
        %v1422 = vpop.f32.mrf.mxu0
        %v1423 = vadd.f32 %v1380, %v1422
        %1424 = vdwg.mxu0
        %1425 = vmatprep.subr.bf16.mxu0 %v1194
        %1426 = vmatpush1.bf16.msra.mxu0 %v1193
        %1427 = vmatprep.subr.bf16.mxu0 %v1192
        %1428 = vmatpush1.bf16.msra.mxu0 %v1191
        %1429 = vmatprep.subr.bf16.mxu0 %v1190
        %1430 = vmatpush1.bf16.msra.mxu0 %v1189
        %1431 = vmatprep.subr.bf16.mxu0 %v1188
        %1432 = vmatpush1.bf16.msra.mxu0 %v1187
        %1433 = vmatprep.subr.bf16.mxu0 %v1186
        %1434 = vmatpush1.bf16.msra.mxu0 %v1185
        %1435 = vmatprep.subr.bf16.mxu0 %v1184
        %1436 = vmatpush1.bf16.msra.mxu0 %v1183
        %1437 = vmatprep.subr.bf16.mxu0 %v1182
        %1438 = vmatpush1.bf16.msra.mxu0 %v1181
        %1439 = vmatprep.subr.bf16.mxu0 %v1180
        %1440 = vmatpush1.bf16.msra.mxu0 %v1179
        %1441 = vmatprep.subr.bf16.mxu0 %v1210
        %1442 = vmatpush2.bf16.msra.mxu0 %v1209
        %1443 = vmatprep.subr.bf16.mxu0 %v1208
        %1444 = vmatpush2.bf16.msra.mxu0 %v1207
        %1445 = vmatprep.subr.bf16.mxu0 %v1206
        %1446 = vmatpush2.bf16.msra.mxu0 %v1205
        %1447 = vmatprep.subr.bf16.mxu0 %v1204
        %1448 = vmatpush2.bf16.msra.mxu0 %v1203
        %1449 = vmatprep.subr.bf16.mxu0 %v1202
        %1450 = vmatpush2.bf16.msra.mxu0 %v1201
        %1451 = vmatprep.subr.bf16.mxu0 %v1200
        %1452 = vmatpush2.bf16.msra.mxu0 %v1199
        %1453 = vmatprep.subr.bf16.mxu0 %v1198
        %1454 = vmatpush2.bf16.msra.mxu0 %v1197
        %1455 = vmatprep.subr.bf16.mxu0 %v1196
        %1456 = vmatpush2.bf16.msra.mxu0 %v1195
        %1457 = vmatprep.mubr.bf16.mxu0 %v770
        %1458 = vmatmul.mubr.bf16.gmra.mxu0 %v769
        %v1459 = vpop.f32.mrf.mxu0
        %v1460 = vadd.f32 %v1417, %v1459
        %v1461 = vpop.f32.mrf.mxu0
        %v1462 = vadd.f32 %v1419, %v1461
        %v1463 = vpop.f32.mrf.mxu0
        %v1464 = vadd.f32 %v1421, %v1463
        %v1465 = vpop.f32.mrf.mxu0
        %v1466 = vadd.f32 %v1423, %v1465
        %1467 = vdwg.mxu0
        %1468 = vmatprep.subr.bf16.mxu0 %v1226
        %1469 = vmatpush1.bf16.msra.mxu0 %v1225
        %1470 = vmatprep.subr.bf16.mxu0 %v1224
        %1471 = vmatpush1.bf16.msra.mxu0 %v1223
        %1472 = vmatprep.subr.bf16.mxu0 %v1222
        %1473 = vmatpush1.bf16.msra.mxu0 %v1221
        %1474 = vmatprep.subr.bf16.mxu0 %v1220
        %1475 = vmatpush1.bf16.msra.mxu0 %v1219
        %1476 = vmatprep.subr.bf16.mxu0 %v1218
        %1477 = vmatpush1.bf16.msra.mxu0 %v1217
        %1478 = vmatprep.subr.bf16.mxu0 %v1216
        %1479 = vmatpush1.bf16.msra.mxu0 %v1215
        %1480 = vmatprep.subr.bf16.mxu0 %v1214
        %1481 = vmatpush1.bf16.msra.mxu0 %v1213
        %1482 = vmatprep.subr.bf16.mxu0 %v1212
        %1483 = vmatpush1.bf16.msra.mxu0 %v1211
        %1484 = vmatprep.subr.bf16.mxu0 0
        %1485 = vmatpush2.bf16.msra.mxu0 0
        %1486 = vmatprep.subr.bf16.mxu0 0
        %1487 = vmatpush2.bf16.msra.mxu0 0
        %1488 = vmatprep.subr.bf16.mxu0 0
        %1489 = vmatpush2.bf16.msra.mxu0 0
        %1490 = vmatprep.subr.bf16.mxu0 0
        %1491 = vmatpush2.bf16.msra.mxu0 0
        %1492 = vmatprep.subr.bf16.mxu0 0
        %1493 = vmatpush2.bf16.msra.mxu0 0
        %1494 = vmatprep.subr.bf16.mxu0 0
        %1495 = vmatpush2.bf16.msra.mxu0 0
        %1496 = vmatprep.subr.bf16.mxu0 0
        %1497 = vmatpush2.bf16.msra.mxu0 0
        %1498 = vmatprep.subr.bf16.mxu0 0
        %1499 = vmatpush2.bf16.msra.mxu0 0
        %1500 = vmatprep.mubr.bf16.mxu0 0
        %1501 = vmatmul.mubr.bf16.gmra.mxu0 %v771
        %v1502 = vpop.f32.mrf.mxu0
        %v1503 = vadd.f32 %v1460, %v1502
        %v1504 = vpop.f32.mrf.mxu0
        %v1505 = vadd.f32 %v1462, %v1504
        %v1506 = vpop.f32.mrf.mxu0
        %v1507 = vadd.f32 %v1464, %v1506
        %v1508 = vpop.f32.mrf.mxu0
        %v1509 = vadd.f32 %v1466, %v1508
        %1510 = vdwg.mxu0
        %v1511 = vmax.f32 %v1503, 0.0
        %v1512 = vmax.f32 %v1505, 0.0
        %v1513 = vmax.f32 %v1507, 0.0
        %v1514 = vmax.f32 %v1509, 0.0
        %v1515 = vpack.c.bf16 %v1513, %v1511
        %v1516 = vpack.c.bf16 %v1514, %v1512
        %v1517 = vld [vmem:[#allocation7] sm:$0xf]
        %v1518 = vld [vmem:[#allocation7 + $0x4] sm:$0xf]
        %v1519 = vld [vmem:[#allocation7 + $0x8] sm:$0xf]
        %v1520 = vld [vmem:[#allocation7 + $0xc] sm:$0xf]
        %v1521 = vld [vmem:[#allocation7 + $0x10] sm:$0xf]
        %v1522 = vld [vmem:[#allocation7 + $0x14] sm:$0xf]
        %v1523 = vld [vmem:[#allocation7 + $0x18] sm:$0xf]
        %v1524 = vld [vmem:[#allocation7 + $0x1c] sm:$0xf]
        %v1525 = vld [vmem:[#allocation7 + $0x20] sm:$0xf]
        %v1526 = vld [vmem:[#allocation7 + $0x24] sm:$0xf]
        %v1527 = vld [vmem:[#allocation7 + $0x28] sm:$0xf]
        %v1528 = vld [vmem:[#allocation7 + $0x2c] sm:$0xf]
        %v1529 = vld [vmem:[#allocation7 + $0x30] sm:$0xf]
        %v1530 = vld [vmem:[#allocation7 + $0x34] sm:$0xf]
        %v1531 = vld [vmem:[#allocation7 + $0x38] sm:$0xf]
        %v1532 = vld [vmem:[#allocation7 + $0x3c] sm:$0xf]
        %v1533 = vld [vmem:[#allocation7 + $0x40] sm:$0xf]
        %v1534 = vld [vmem:[#allocation7 + $0x44] sm:$0xf]
        %v1535 = vld [vmem:[#allocation7 + $0x48] sm:$0xf]
        %v1536 = vld [vmem:[#allocation7 + $0x4c] sm:$0xf]
        %v1537 = vld [vmem:[#allocation7 + $0x50] sm:$0xf]
        %v1538 = vld [vmem:[#allocation7 + $0x54] sm:$0xf]
        %v1539 = vld [vmem:[#allocation7 + $0x58] sm:$0xf]
        %v1540 = vld [vmem:[#allocation7 + $0x5c] sm:$0xf]
        %v1541 = vld [vmem:[#allocation7 + $0x60] sm:$0xf]
        %v1542 = vld [vmem:[#allocation7 + $0x64] sm:$0xf]
        %v1543 = vld [vmem:[#allocation7 + $0x68] sm:$0xf]
        %v1544 = vld [vmem:[#allocation7 + $0x6c] sm:$0xf]
        %v1545 = vld [vmem:[#allocation7 + $0x70] sm:$0xf]
        %v1546 = vld [vmem:[#allocation7 + $0x74] sm:$0xf]
        %v1547 = vld [vmem:[#allocation7 + $0x78] sm:$0xf]
        %v1548 = vld [vmem:[#allocation7 + $0x7c] sm:$0xf]
        %v1549 = vld [vmem:[%s5] sm:$0x1]
        %v1551 = vlaneseq
        %v1552 = vshrl.u32 %v1551, 7
        %v1553 = vsub.s32 0, %v1552
        %v1554 = vrot.slane %v1549, %v1553
        %v1588 = vunpack.c.l.b16 %v1517
        %v1589 = vunpack.c.l.b16 %v1518
        %v1590 = vunpack.c.l.b16 %v1519
        %v1591 = vunpack.c.l.b16 %v1520
        %v1592 = vunpack.c.l.b16 %v1521
        %v1593 = vunpack.c.l.b16 %v1522
        %v1594 = vunpack.c.l.b16 %v1523
        %v1595 = vunpack.c.l.b16 %v1524
        %v1596 = vunpack.c.l.b16 %v1525
        %v1597 = vunpack.c.l.b16 %v1526
        %v1598 = vunpack.c.l.b16 %v1527
        %v1599 = vunpack.c.l.b16 %v1528
        %v1600 = vunpack.c.l.b16 %v1529
        %v1601 = vunpack.c.l.b16 %v1530
        %v1602 = vunpack.c.l.b16 %v1531
        %v1603 = vunpack.c.l.b16 %v1532
        %v1604 = vunpack.c.l.b16 %v1533
        %v1605 = vunpack.c.l.b16 %v1534
        %v1606 = vunpack.c.l.b16 %v1535
        %v1607 = vunpack.c.l.b16 %v1536
        %v1608 = vunpack.c.l.b16 %v1537
        %v1609 = vunpack.c.l.b16 %v1538
        %v1610 = vunpack.c.l.b16 %v1539
        %v1611 = vunpack.c.l.b16 %v1540
        %v1612 = vunpack.c.l.b16 %v1541
        %v1613 = vunpack.c.l.b16 %v1542
        %v1614 = vunpack.c.l.b16 %v1543
        %v1615 = vunpack.c.l.b16 %v1544
        %v1616 = vunpack.c.l.b16 %v1545
        %v1617 = vunpack.c.l.b16 %v1546
        %v1618 = vunpack.c.l.b16 %v1547
        %v1619 = vunpack.c.l.b16 %v1548
        %v1620 = vpack.c.b16 %v1589, %v1588
        %v1621 = vpack.c.b16 %v1591, %v1590
        %v1622 = vpack.c.b16 %v1593, %v1592
        %v1623 = vpack.c.b16 %v1595, %v1594
        %v1624 = vpack.c.b16 %v1597, %v1596
        %v1625 = vpack.c.b16 %v1599, %v1598
        %v1626 = vpack.c.b16 %v1601, %v1600
        %v1627 = vpack.c.b16 %v1603, %v1602
        %v1628 = vpack.c.b16 %v1605, %v1604
        %v1629 = vpack.c.b16 %v1607, %v1606
        %v1630 = vpack.c.b16 %v1609, %v1608
        %v1631 = vpack.c.b16 %v1611, %v1610
        %v1632 = vpack.c.b16 %v1613, %v1612
        %v1633 = vpack.c.b16 %v1615, %v1614
        %v1634 = vpack.c.b16 %v1617, %v1616
        %v1635 = vpack.c.b16 %v1619, %v1618
        %1652 = vmatprep.subr.bf16.mxu0 0
        %1653 = vmatpush1.bf16.msra.mxu0 %v1627
        %1654 = vmatprep.subr.bf16.mxu0 0
        %1655 = vmatpush1.bf16.msra.mxu0 %v1626
        %1656 = vmatprep.subr.bf16.mxu0 0
        %1657 = vmatpush1.bf16.msra.mxu0 %v1625
        %1658 = vmatprep.subr.bf16.mxu0 0
        %1659 = vmatpush1.bf16.msra.mxu0 %v1624
        %1660 = vmatprep.subr.bf16.mxu0 0
        %1661 = vmatpush1.bf16.msra.mxu0 %v1623
        %1662 = vmatprep.subr.bf16.mxu0 0
        %1663 = vmatpush1.bf16.msra.mxu0 %v1622
        %1664 = vmatprep.subr.bf16.mxu0 0
        %1665 = vmatpush1.bf16.msra.mxu0 %v1621
        %1666 = vmatprep.subr.bf16.mxu0 0
        %1667 = vmatpush1.bf16.msra.mxu0 %v1620
        %1668 = vmatprep.subr.bf16.mxu0 0
        %1669 = vmatpush2.bf16.msra.mxu0 %v1635
        %1670 = vmatprep.subr.bf16.mxu0 0
        %1671 = vmatpush2.bf16.msra.mxu0 %v1634
        %1672 = vmatprep.subr.bf16.mxu0 0
        %1673 = vmatpush2.bf16.msra.mxu0 %v1633
        %1674 = vmatprep.subr.bf16.mxu0 0
        %1675 = vmatpush2.bf16.msra.mxu0 %v1632
        %1676 = vmatprep.subr.bf16.mxu0 0
        %1677 = vmatpush2.bf16.msra.mxu0 %v1631
        %1678 = vmatprep.subr.bf16.mxu0 0
        %1679 = vmatpush2.bf16.msra.mxu0 %v1630
        %1680 = vmatprep.subr.bf16.mxu0 0
        %1681 = vmatpush2.bf16.msra.mxu0 %v1629
        %1682 = vmatprep.subr.bf16.mxu0 0
        %1683 = vmatpush2.bf16.msra.mxu0 %v1628
        %1684 = vmatprep.mubr.bf16.mxu0 %v1516
        %1685 = vmatmul.mubr.bf16.gmra.mxu0 %v1515
        %v1686 = vpop.f32.mrf.mxu0
        %v1687 = vadd.f32 %v1554, %v1686
        %v1688 = vpop.f32.mrf.mxu0
        %v1689 = vpop.f32.mrf.mxu0
        %v1690 = vadd.f32 %v1554, %v1689
        %v1691 = vpop.f32.mrf.mxu0
        %1692 = vdwg.mxu0
        %v1693 = vmax.f32 %v1687, 0.0
        %v1694 = vmax.f32 %v1690, 0.0
        %v1695 = vpack.c.bf16 %v1694, %v1693
        %v1696 = vld [vmem:[%s6] sm:$0xf]
        %v1697 = vld [vmem:[%s6 + $0x4] sm:$0xf]
        %v1698 = vld [vmem:[%s6 + $0x8] sm:$0xf]
        %v1699 = vld [vmem:[%s6 + $0xc] sm:$0xf]
        %v1700 = vld [vmem:[%s6 + $0x10] sm:$0xf]
        %v1701 = vld [vmem:[%s6 + $0x14] sm:$0xf]
        %v1702 = vld [vmem:[%s6 + $0x18] sm:$0xf]
        %v1703 = vld [vmem:[%s6 + $0x1c] sm:$0xf]
        %v1704 = vld [vmem:[%s6 + $0x20] sm:$0xf]
        %v1705 = vld [vmem:[%s6 + $0x24] sm:$0xf]
        %v1706 = vld [vmem:[%s6 + $0x28] sm:$0xf]
        %v1707 = vld [vmem:[%s6 + $0x2c] sm:$0xf]
        %v1708 = vld [vmem:[%s6 + $0x30] sm:$0xf]
        %v1709 = vld [vmem:[%s6 + $0x34] sm:$0xf]
        %v1710 = vld [vmem:[%s6 + $0x38] sm:$0xf]
        %v1711 = vld [vmem:[%s6 + $0x3c] sm:$0xf]
        %v1712 = vld [vmem:[%s7] sm:$0x1]
        %v1714 = vlaneseq
        %v1715 = vshrl.u32 %v1714, 7
        %v1716 = vsub.s32 0, %v1715
        %v1717 = vrot.slane %v1712, %v1716
        %v1735 = vunpack.c.l.b16 %v1696
        %v1736 = vunpack.c.l.b16 %v1697
        %v1737 = vunpack.c.l.b16 %v1698
        %v1738 = vunpack.c.l.b16 %v1699
        %v1739 = vunpack.c.l.b16 %v1700
        %v1740 = vunpack.c.l.b16 %v1701
        %v1741 = vunpack.c.l.b16 %v1702
        %v1742 = vunpack.c.l.b16 %v1703
        %v1743 = vunpack.c.l.b16 %v1704
        %v1744 = vunpack.c.l.b16 %v1705
        %v1745 = vunpack.c.l.b16 %v1706
        %v1746 = vunpack.c.l.b16 %v1707
        %v1747 = vunpack.c.l.b16 %v1708
        %v1748 = vunpack.c.l.b16 %v1709
        %v1749 = vunpack.c.l.b16 %v1710
        %v1750 = vunpack.c.l.b16 %v1711
        %v1751 = vpack.c.b16 %v1736, %v1735
        %v1752 = vpack.c.b16 %v1738, %v1737
        %v1753 = vpack.c.b16 %v1740, %v1739
        %v1754 = vpack.c.b16 %v1742, %v1741
        %v1755 = vpack.c.b16 %v1744, %v1743
        %v1756 = vpack.c.b16 %v1746, %v1745
        %v1757 = vpack.c.b16 %v1748, %v1747
        %v1758 = vpack.c.b16 %v1750, %v1749
        %1767 = vmatprep.subr.bf16.mxu0 0
        %1768 = vmatpush1.bf16.msra.mxu0 %v1758
        %1769 = vmatprep.subr.bf16.mxu0 0
        %1770 = vmatpush1.bf16.msra.mxu0 %v1757
        %1771 = vmatprep.subr.bf16.mxu0 0
        %1772 = vmatpush1.bf16.msra.mxu0 %v1756
        %1773 = vmatprep.subr.bf16.mxu0 0
        %1774 = vmatpush1.bf16.msra.mxu0 %v1755
        %1775 = vmatprep.subr.bf16.mxu0 0
        %1776 = vmatpush1.bf16.msra.mxu0 %v1754
        %1777 = vmatprep.subr.bf16.mxu0 0
        %1778 = vmatpush1.bf16.msra.mxu0 %v1753
        %1779 = vmatprep.subr.bf16.mxu0 0
        %1780 = vmatpush1.bf16.msra.mxu0 %v1752
        %1781 = vmatprep.subr.bf16.mxu0 0
        %1782 = vmatpush1.bf16.msra.mxu0 %v1751
        %1783 = vmatprep.subr.bf16.mxu0 0
        %1784 = vmatpush2.bf16.msra.mxu0 0
        %1785 = vmatprep.subr.bf16.mxu0 0
        %1786 = vmatpush2.bf16.msra.mxu0 0
        %1787 = vmatprep.subr.bf16.mxu0 0
        %1788 = vmatpush2.bf16.msra.mxu0 0
        %1789 = vmatprep.subr.bf16.mxu0 0
        %1790 = vmatpush2.bf16.msra.mxu0 0
        %1791 = vmatprep.subr.bf16.mxu0 0
        %1792 = vmatpush2.bf16.msra.mxu0 0
        %1793 = vmatprep.subr.bf16.mxu0 0
        %1794 = vmatpush2.bf16.msra.mxu0 0
        %1795 = vmatprep.subr.bf16.mxu0 0
        %1796 = vmatpush2.bf16.msra.mxu0 0
        %1797 = vmatprep.subr.bf16.mxu0 0
        %1798 = vmatpush2.bf16.msra.mxu0 0
        %1799 = vmatprep.mubr.bf16.mxu0 0
        %1800 = vmatmul.mubr.bf16.gmra.mxu0 %v1695
        %v1801 = vpop.f32.mrf.mxu0
        %v1802 = vadd.f32 %v1717, %v1801
        %v1803 = vpop.f32.mrf.mxu0
        %v1804 = vpop.f32.mrf.mxu0
        %v1805 = vadd.f32 %v1717, %v1804
        %v1806 = vpop.f32.mrf.mxu0
        %1807 = vdwg.mxu0
        %1808 = vst [vmem:[%s598] sm:$0xff] %v1802
        %1809 = vst [vmem:[%s598 + $0x8] sm:$0xff] %v1805
        %v1810 = vmul.f32 %v1802, 0.5
        %v1811 = vmul.f32 %v1805, 0.5
        %v1812 = vpack.c.bf16 %v1811, %v1810
        %v1814 = vmul.bf16 %v1812, 1069105081
        %v1815 = vpow.bf16.pop %v1814
        %v1816 = vunpack.c.l.bf16 %v1815
        %v1817 = vunpack.c.h.bf16 %v1815
        %v1818 = vld [vmem:[%s604] sm:$0xff]
        %v1819 = vld [vmem:[%s604 + $0x8] sm:$0xff]
        %1822 = vrot.lane.b32.xlu0 %v1816, 96
        %v1823 = vpop.permute.xlu0 %1822
        %1824 = vrot.lane.b32.xlu0 %v1817, 96
        %v1825 = vpop.permute.xlu0 %1824
        %v1828 = vmul.f32 %v1818, %v1823
        %v1829 = vmul.f32 %v1819, %v1825
        %v1830 = vadd.f32 %v1828, %v1802
        %v1831 = vadd.f32 %v1829, %v1805
        %v1832 = vpack.c.bf16 %v1831, %v1830
        %v1833 = vld [vmem:[%s8] sm:$0xf]
        %v1834 = vld [vmem:[%s8 + $0x4] sm:$0xf]
        %v1835 = vld [vmem:[%s8 + $0x8] sm:$0xf]
        %v1836 = vld [vmem:[%s8 + $0xc] sm:$0xf]
        %v1837 = vld [vmem:[%s9] sm:$0x1]
        %v1839 = vlaneseq
        %v1840 = vshrl.u32 %v1839, 7
        %v1841 = vsub.s32 0, %v1840
        %v1842 = vrot.slane %v1837, %v1841
        %v1848 = vunpack.c.l.b16 %v1833
        %v1849 = vunpack.c.l.b16 %v1834
        %v1850 = vunpack.c.l.b16 %v1835
        %v1851 = vunpack.c.l.b16 %v1836
        %v1852 = vpack.c.b16 %v1849, %v1848
        %v1853 = vpack.c.b16 %v1851, %v1850
        %vm1856 = vcmask 261120
        %v1858 = vsel %vm1856, %v1832, 0
        %1860 = vmatprep.subr.bf16.mxu0 0
        %1861 = vmatpush1.bf16.msra.mxu0 0
        %1862 = vmatprep.subr.bf16.mxu0 0
        %1863 = vmatpush1.bf16.msra.mxu0 0
        %1864 = vmatprep.subr.bf16.mxu0 0
        %1865 = vmatpush1.bf16.msra.mxu0 0
        %1866 = vmatprep.subr.bf16.mxu0 0
        %1867 = vmatpush1.bf16.msra.mxu0 0
        %1868 = vmatprep.subr.bf16.mxu0 0
        %1869 = vmatpush1.bf16.msra.mxu0 0
        %1870 = vmatprep.subr.bf16.mxu0 0
        %1871 = vmatpush1.bf16.msra.mxu0 0
        %1872 = vmatprep.subr.bf16.mxu0 0
        %1873 = vmatpush1.bf16.msra.mxu0 %v1853
        %1874 = vmatprep.subr.bf16.mxu0 0
        %1875 = vmatpush1.bf16.msra.mxu0 %v1852
        %1876 = vmatprep.subr.bf16.mxu0 0
        %1877 = vmatpush2.bf16.msra.mxu0 0
        %1878 = vmatprep.subr.bf16.mxu0 0
        %1879 = vmatpush2.bf16.msra.mxu0 0
        %1880 = vmatprep.subr.bf16.mxu0 0
        %1881 = vmatpush2.bf16.msra.mxu0 0
        %1882 = vmatprep.subr.bf16.mxu0 0
        %1883 = vmatpush2.bf16.msra.mxu0 0
        %1884 = vmatprep.subr.bf16.mxu0 0
        %1885 = vmatpush2.bf16.msra.mxu0 0
        %1886 = vmatprep.subr.bf16.mxu0 0
        %1887 = vmatpush2.bf16.msra.mxu0 0
        %1888 = vmatprep.subr.bf16.mxu0 0
        %1889 = vmatpush2.bf16.msra.mxu0 0
        %1890 = vmatprep.subr.bf16.mxu0 0
        %1891 = vmatpush2.bf16.msra.mxu0 0
        %1892 = vmatprep.mubr.bf16.mxu0 0
        %1893 = vmatmul.mubr.bf16.gmra.mxu0 %v1858
        %v1894 = vpop.f32.mrf.mxu0
        %v1895 = vadd.f32 %v1842, %v1894
        %v1896 = vpop.f32.mrf.mxu0
        %v1897 = vpop.f32.mrf.mxu0
        %v1898 = vadd.f32 %v1842, %v1897
        %v1899 = vpop.f32.mrf.mxu0
        %1900 = vdwg.mxu0
        %v1901 = vmax.f32 %v1895, 0.0
        %v1902 = vmax.f32 %v1898, 0.0
        %v1903 = vpack.c.bf16 %v1902, %v1901
        %v1904 = vld [vmem:[#allocation8] sm:$0xff]
        %v1905 = vld [vmem:[#allocation8 + $0x8] sm:$0xff]
        %v1906 = vld [vmem:[#allocation8 + $0x10] sm:$0xff]
        %v1907 = vld [vmem:[#allocation8 + $0x18] sm:$0xff]
        %v1908 = vld [vmem:[#allocation8 + $0x20] sm:$0xff]
        %v1909 = vld [vmem:[#allocation8 + $0x28] sm:$0xff]
        %v1910 = vld [vmem:[#allocation8 + $0x30] sm:$0xff]
        %v1911 = vld [vmem:[#allocation8 + $0x38] sm:$0xff]
        %v1912 = vld [vmem:[#allocation8 + $0x40] sm:$0xff]
        %v1913 = vld [vmem:[#allocation8 + $0x48] sm:$0xff]
        %v1914 = vld [vmem:[#allocation8 + $0x50] sm:$0xff]
        %v1915 = vld [vmem:[#allocation8 + $0x58] sm:$0xff]
        %v1916 = vld [vmem:[#allocation8 + $0x60] sm:$0xff]
        %v1917 = vld [vmem:[#allocation8 + $0x68] sm:$0xff]
        %v1918 = vld [vmem:[#allocation8 + $0x70] sm:$0xff]
        %v1919 = vld [vmem:[#allocation8 + $0x78] sm:$0xff]
        %v1920 = vld [vmem:[%s11] sm:$0x3]
        %v1922 = vlaneseq
        %v1923 = vshrl.u32 %v1922, 7
        %v1924 = vsub.s32 0, %v1923
        %v1925 = vrot.slane %v1920, %v1924
        %v1926 = vlaneseq
        %v1927 = vshrl.u32 %v1926, 7
        %v1928 = vsub.s32 1, %v1927
        %v1929 = vrot.slane %v1920, %v1928
        %v1948 = vunpack.c.l.b16 %v1904
        %v1949 = vunpack.c.h.b16 %v1904
        %v1950 = vunpack.c.l.b16 %v1905
        %v1951 = vunpack.c.h.b16 %v1905
        %v1952 = vunpack.c.l.b16 %v1906
        %v1953 = vunpack.c.h.b16 %v1906
        %v1954 = vunpack.c.l.b16 %v1907
        %v1955 = vunpack.c.h.b16 %v1907
        %v1956 = vunpack.c.l.b16 %v1908
        %v1957 = vunpack.c.h.b16 %v1908
        %v1958 = vunpack.c.l.b16 %v1909
        %v1959 = vunpack.c.h.b16 %v1909
        %v1960 = vunpack.c.l.b16 %v1910
        %v1961 = vunpack.c.h.b16 %v1910
        %v1962 = vunpack.c.l.b16 %v1911
        %v1963 = vunpack.c.h.b16 %v1911
        %v1964 = vunpack.c.l.b16 %v1912
        %v1965 = vunpack.c.h.b16 %v1912
        %v1966 = vunpack.c.l.b16 %v1913
        %v1967 = vunpack.c.h.b16 %v1913
        %v1968 = vunpack.c.l.b16 %v1914
        %v1969 = vunpack.c.h.b16 %v1914
        %v1970 = vunpack.c.l.b16 %v1915
        %v1971 = vunpack.c.h.b16 %v1915
        %v1972 = vunpack.c.l.b16 %v1916
        %v1973 = vunpack.c.h.b16 %v1916
        %v1974 = vunpack.c.l.b16 %v1917
        %v1975 = vunpack.c.h.b16 %v1917
        %v1976 = vunpack.c.l.b16 %v1918
        %v1977 = vunpack.c.h.b16 %v1918
        %v1978 = vunpack.c.l.b16 %v1919
        %v1979 = vunpack.c.h.b16 %v1919
        %v1980 = vpack.c.b16 %v1950, %v1948
        %v1981 = vpack.c.b16 %v1951, %v1949
        %v1982 = vpack.c.b16 %v1954, %v1952
        %v1983 = vpack.c.b16 %v1955, %v1953
        %v1984 = vpack.c.b16 %v1958, %v1956
        %v1985 = vpack.c.b16 %v1959, %v1957
        %v1986 = vpack.c.b16 %v1962, %v1960
        %v1987 = vpack.c.b16 %v1963, %v1961
        %v1988 = vpack.c.b16 %v1966, %v1964
        %v1989 = vpack.c.b16 %v1967, %v1965
        %v1990 = vpack.c.b16 %v1970, %v1968
        %v1991 = vpack.c.b16 %v1971, %v1969
        %v1992 = vpack.c.b16 %v1974, %v1972
        %v1993 = vpack.c.b16 %v1975, %v1973
        %v1994 = vpack.c.b16 %v1978, %v1976
        %v1995 = vpack.c.b16 %v1979, %v1977
        %2012 = vmatprep.subr.bf16.mxu0 %v1995
        %2013 = vmatpush1.bf16.msra.mxu0 %v1994
        %2014 = vmatprep.subr.bf16.mxu0 %v1993
        %2015 = vmatpush1.bf16.msra.mxu0 %v1992
        %2016 = vmatprep.subr.bf16.mxu0 %v1991
        %2017 = vmatpush1.bf16.msra.mxu0 %v1990
        %2018 = vmatprep.subr.bf16.mxu0 %v1989
        %2019 = vmatpush1.bf16.msra.mxu0 %v1988
        %2020 = vmatprep.subr.bf16.mxu0 %v1987
        %2021 = vmatpush1.bf16.msra.mxu0 %v1986
        %2022 = vmatprep.subr.bf16.mxu0 %v1985
        %2023 = vmatpush1.bf16.msra.mxu0 %v1984
        %2024 = vmatprep.subr.bf16.mxu0 %v1983
        %2025 = vmatpush1.bf16.msra.mxu0 %v1982
        %2026 = vmatprep.subr.bf16.mxu0 %v1981
        %2027 = vmatpush1.bf16.msra.mxu0 %v1980
        %2028 = vmatprep.subr.bf16.mxu0 0
        %2029 = vmatpush2.bf16.msra.mxu0 0
        %2030 = vmatprep.subr.bf16.mxu0 0
        %2031 = vmatpush2.bf16.msra.mxu0 0
        %2032 = vmatprep.subr.bf16.mxu0 0
        %2033 = vmatpush2.bf16.msra.mxu0 0
        %2034 = vmatprep.subr.bf16.mxu0 0
        %2035 = vmatpush2.bf16.msra.mxu0 0
        %2036 = vmatprep.subr.bf16.mxu0 0
        %2037 = vmatpush2.bf16.msra.mxu0 0
        %2038 = vmatprep.subr.bf16.mxu0 0
        %2039 = vmatpush2.bf16.msra.mxu0 0
        %2040 = vmatprep.subr.bf16.mxu0 0
        %2041 = vmatpush2.bf16.msra.mxu0 0
        %2042 = vmatprep.subr.bf16.mxu0 0
        %2043 = vmatpush2.bf16.msra.mxu0 0
        %2044 = vmatprep.mubr.bf16.mxu0 0
        %2045 = vmatmul.mubr.bf16.gmra.mxu0 %v1903
        %v2046 = vpop.f32.mrf.mxu0
        %v2047 = vadd.f32 %v1925, %v2046
        %v2048 = vpop.f32.mrf.mxu0
        %v2049 = vadd.f32 %v1929, %v2048
        %v2050 = vpop.f32.mrf.mxu0
        %v2051 = vadd.f32 %v1925, %v2050
        %v2052 = vpop.f32.mrf.mxu0
        %v2053 = vadd.f32 %v1929, %v2052
        %2054 = vdwg.mxu0
        %v2055 = vmax.f32 %v2047, 0.0
        %v2056 = vmax.f32 %v2049, 0.0
        %v2057 = vmax.f32 %v2051, 0.0
        %v2058 = vmax.f32 %v2053, 0.0
        %v2059 = vpack.c.bf16 %v2057, %v2055
        %v2060 = vpack.c.bf16 %v2058, %v2056
        %v2061 = vld [vmem:[#allocation10] sm:$0xff]
        %v2062 = vld [vmem:[#allocation10 + $0x8] sm:$0xff]
        %v2063 = vld [vmem:[#allocation10 + $0x10] sm:$0xff]
        %v2064 = vld [vmem:[#allocation10 + $0x18] sm:$0xf]
        %v2065 = vld [vmem:[#allocation10 + $0x1c] sm:$0xff]
        %v2066 = vld [vmem:[#allocation10 + $0x24] sm:$0xff]
        %v2067 = vld [vmem:[#allocation10 + $0x2c] sm:$0xff]
        %v2068 = vld [vmem:[#allocation10 + $0x34] sm:$0xf]
        %v2069 = vld [vmem:[#allocation10 + $0x38] sm:$0xff]
        %v2070 = vld [vmem:[#allocation10 + $0x40] sm:$0xff]
        %v2071 = vld [vmem:[#allocation10 + $0x48] sm:$0xff]
        %v2072 = vld [vmem:[#allocation10 + $0x50] sm:$0xf]
        %v2073 = vld [vmem:[#allocation10 + $0x54] sm:$0xff]
        %v2074 = vld [vmem:[#allocation10 + $0x5c] sm:$0xff]
        %v2075 = vld [vmem:[#allocation10 + $0x64] sm:$0xff]
        %v2076 = vld [vmem:[#allocation10 + $0x6c] sm:$0xf]
        %v2077 = vld [vmem:[#allocation10 + $0x70] sm:$0xff]
        %v2078 = vld [vmem:[#allocation10 + $0x78] sm:$0xff]
        %v2079 = vld [vmem:[#allocation10 + $0x80] sm:$0xff]
        %v2080 = vld [vmem:[#allocation10 + $0x88] sm:$0xf]
        %v2081 = vld [vmem:[#allocation10 + $0x8c] sm:$0xff]
        %v2082 = vld [vmem:[#allocation10 + $0x94] sm:$0xff]
        %v2083 = vld [vmem:[#allocation10 + $0x9c] sm:$0xff]
        %v2084 = vld [vmem:[#allocation10 + $0xa4] sm:$0xf]
        %v2085 = vld [vmem:[#allocation10 + $0xa8] sm:$0xff]
        %v2086 = vld [vmem:[#allocation10 + $0xb0] sm:$0xff]
        %v2087 = vld [vmem:[#allocation10 + $0xb8] sm:$0xff]
        %v2088 = vld [vmem:[#allocation10 + $0xc0] sm:$0xf]
        %v2089 = vld [vmem:[#allocation10 + $0xc4] sm:$0xff]
        %v2090 = vld [vmem:[#allocation10 + $0xcc] sm:$0xff]
        %v2091 = vld [vmem:[#allocation10 + $0xd4] sm:$0xff]
        %v2092 = vld [vmem:[#allocation10 + $0xdc] sm:$0xf]
        %v2093 = vld [vmem:[#allocation10 + $0xe0] sm:$0xff]
        %v2094 = vld [vmem:[#allocation10 + $0xe8] sm:$0xff]
        %v2095 = vld [vmem:[#allocation10 + $0xf0] sm:$0xff]
        %v2096 = vld [vmem:[#allocation10 + $0xf8] sm:$0xf]
        %v2097 = vld [vmem:[#allocation10 + $0xfc] sm:$0xff]
        %v2098 = vld [vmem:[#allocation10 + $0x104] sm:$0xff]
        %v2099 = vld [vmem:[#allocation10 + $0x10c] sm:$0xff]
        %v2100 = vld [vmem:[#allocation10 + $0x114] sm:$0xf]
        %v2101 = vld [vmem:[#allocation10 + $0x118] sm:$0xff]
        %v2102 = vld [vmem:[#allocation10 + $0x120] sm:$0xff]
        %v2103 = vld [vmem:[#allocation10 + $0x128] sm:$0xff]
        %v2104 = vld [vmem:[#allocation10 + $0x130] sm:$0xf]
        %v2105 = vld [vmem:[#allocation10 + $0x134] sm:$0xff]
        %v2106 = vld [vmem:[#allocation10 + $0x13c] sm:$0xff]
        %v2107 = vld [vmem:[#allocation10 + $0x144] sm:$0xff]
        %v2108 = vld [vmem:[#allocation10 + $0x14c] sm:$0xf]
        %v2109 = vld [vmem:[#allocation10 + $0x150] sm:$0xff]
        %v2110 = vld [vmem:[#allocation10 + $0x158] sm:$0xff]
        %v2111 = vld [vmem:[#allocation10 + $0x160] sm:$0xff]
        %v2112 = vld [vmem:[#allocation10 + $0x168] sm:$0xf]
        %v2113 = vld [vmem:[#allocation10 + $0x16c] sm:$0xff]
        %v2114 = vld [vmem:[#allocation10 + $0x174] sm:$0xff]
        %v2115 = vld [vmem:[#allocation10 + $0x17c] sm:$0xff]
        %v2116 = vld [vmem:[#allocation10 + $0x184] sm:$0xf]
        %v2117 = vld [vmem:[#allocation10 + $0x188] sm:$0xff]
        %v2118 = vld [vmem:[#allocation10 + $0x190] sm:$0xff]
        %v2119 = vld [vmem:[#allocation10 + $0x198] sm:$0xff]
        %v2120 = vld [vmem:[#allocation10 + $0x1a0] sm:$0xf]
        %v2121 = vld [vmem:[#allocation10 + $0x1a4] sm:$0xff]
        %v2122 = vld [vmem:[#allocation10 + $0x1ac] sm:$0xff]
        %v2123 = vld [vmem:[#allocation10 + $0x1b4] sm:$0xff]
        %v2124 = vld [vmem:[#allocation10 + $0x1bc] sm:$0xf]
        %v2125 = vld [vmem:[#allocation10 + $0x1c0] sm:$0xff]
        %v2126 = vld [vmem:[#allocation10 + $0x1c8] sm:$0xff]
        %v2127 = vld [vmem:[#allocation10 + $0x1d0] sm:$0xff]
        %v2128 = vld [vmem:[#allocation10 + $0x1d8] sm:$0xf]
        %v2129 = vld [vmem:[#allocation10 + $0x1dc] sm:$0xff]
        %v2130 = vld [vmem:[#allocation10 + $0x1e4] sm:$0xff]
        %v2131 = vld [vmem:[#allocation10 + $0x1ec] sm:$0xff]
        %v2132 = vld [vmem:[#allocation10 + $0x1f4] sm:$0xf]
        %v2133 = vld [vmem:[#allocation10 + $0x1f8] sm:$0xff]
        %v2134 = vld [vmem:[#allocation10 + $0x200] sm:$0xff]
        %v2135 = vld [vmem:[#allocation10 + $0x208] sm:$0xff]
        %v2136 = vld [vmem:[#allocation10 + $0x210] sm:$0xf]
        %v2137 = vld [vmem:[#allocation10 + $0x214] sm:$0xff]
        %v2138 = vld [vmem:[#allocation10 + $0x21c] sm:$0xff]
        %v2139 = vld [vmem:[#allocation10 + $0x224] sm:$0xff]
        %v2140 = vld [vmem:[#allocation10 + $0x22c] sm:$0xf]
        %v2141 = vld [vmem:[#allocation10 + $0x230] sm:$0xff]
        %v2142 = vld [vmem:[#allocation10 + $0x238] sm:$0xff]
        %v2143 = vld [vmem:[#allocation10 + $0x240] sm:$0xff]
        %v2144 = vld [vmem:[#allocation10 + $0x248] sm:$0xf]
        %v2145 = vld [vmem:[#allocation10 + $0x24c] sm:$0xff]
        %v2146 = vld [vmem:[#allocation10 + $0x254] sm:$0xff]
        %v2147 = vld [vmem:[#allocation10 + $0x25c] sm:$0xff]
        %v2148 = vld [vmem:[#allocation10 + $0x264] sm:$0xf]
        %v2149 = vld [vmem:[#allocation10 + $0x268] sm:$0xff]
        %v2150 = vld [vmem:[#allocation10 + $0x270] sm:$0xff]
        %v2151 = vld [vmem:[#allocation10 + $0x278] sm:$0xff]
        %v2152 = vld [vmem:[#allocation10 + $0x280] sm:$0xf]
        %v2153 = vld [vmem:[#allocation10 + $0x284] sm:$0xff]
        %v2154 = vld [vmem:[#allocation10 + $0x28c] sm:$0xff]
        %v2155 = vld [vmem:[#allocation10 + $0x294] sm:$0xff]
        %v2156 = vld [vmem:[#allocation10 + $0x29c] sm:$0xf]
        %v2157 = vld [vmem:[#allocation10 + $0x2a0] sm:$0xff]
        %v2158 = vld [vmem:[#allocation10 + $0x2a8] sm:$0xff]
        %v2159 = vld [vmem:[#allocation10 + $0x2b0] sm:$0xff]
        %v2160 = vld [vmem:[#allocation10 + $0x2b8] sm:$0xf]
        %v2161 = vld [vmem:[#allocation10 + $0x2bc] sm:$0xff]
        %v2162 = vld [vmem:[#allocation10 + $0x2c4] sm:$0xff]
        %v2163 = vld [vmem:[#allocation10 + $0x2cc] sm:$0xff]
        %v2164 = vld [vmem:[#allocation10 + $0x2d4] sm:$0xf]
        %v2165 = vld [vmem:[#allocation10 + $0x2d8] sm:$0xff]
        %v2166 = vld [vmem:[#allocation10 + $0x2e0] sm:$0xff]
        %v2167 = vld [vmem:[#allocation10 + $0x2e8] sm:$0xff]
        %v2168 = vld [vmem:[#allocation10 + $0x2f0] sm:$0xf]
        %v2169 = vld [vmem:[#allocation10 + $0x2f4] sm:$0xff]
        %v2170 = vld [vmem:[#allocation10 + $0x2fc] sm:$0xff]
        %v2171 = vld [vmem:[#allocation10 + $0x304] sm:$0xff]
        %v2172 = vld [vmem:[#allocation10 + $0x30c] sm:$0xf]
        %v2173 = vld [vmem:[#allocation10 + $0x310] sm:$0xff]
        %v2174 = vld [vmem:[#allocation10 + $0x318] sm:$0xff]
        %v2175 = vld [vmem:[#allocation10 + $0x320] sm:$0xff]
        %v2176 = vld [vmem:[#allocation10 + $0x328] sm:$0xf]
        %v2177 = vld [vmem:[#allocation10 + $0x32c] sm:$0xff]
        %v2178 = vld [vmem:[#allocation10 + $0x334] sm:$0xff]
        %v2179 = vld [vmem:[#allocation10 + $0x33c] sm:$0xff]
        %v2180 = vld [vmem:[#allocation10 + $0x344] sm:$0xf]
        %v2181 = vld [vmem:[#allocation10 + $0x348] sm:$0xff]
        %v2182 = vld [vmem:[#allocation10 + $0x350] sm:$0xff]
        %v2183 = vld [vmem:[#allocation10 + $0x358] sm:$0xff]
        %v2184 = vld [vmem:[#allocation10 + $0x360] sm:$0xf]
        %v2185 = vld [vmem:[#allocation10 + $0x364] sm:$0xff]
        %v2186 = vld [vmem:[#allocation10 + $0x36c] sm:$0xff]
        %v2187 = vld [vmem:[#allocation10 + $0x374] sm:$0xff]
        %v2188 = vld [vmem:[#allocation10 + $0x37c] sm:$0xf]
        %v2189 = vld [vmem:[%s13] sm:$0xff]
        %v2191 = vlaneseq
        %v2192 = vshrl.u32 %v2191, 7
        %v2193 = vsub.s32 0, %v2192
        %v2194 = vrot.slane %v2189, %v2193
        %v2195 = vlaneseq
        %v2196 = vshrl.u32 %v2195, 7
        %v2197 = vsub.s32 1, %v2196
        %v2198 = vrot.slane %v2189, %v2197
        %v2199 = vlaneseq
        %v2200 = vshrl.u32 %v2199, 7
        %v2201 = vsub.s32 2, %v2200
        %v2202 = vrot.slane %v2189, %v2201
        %v2203 = vlaneseq
        %v2204 = vshrl.u32 %v2203, 7
        %v2205 = vsub.s32 3, %v2204
        %v2206 = vrot.slane %v2189, %v2205
        %v2207 = vlaneseq
        %v2208 = vshrl.u32 %v2207, 7
        %v2209 = vsub.s32 4, %v2208
        %v2210 = vrot.slane %v2189, %v2209
        %v2211 = vlaneseq
        %v2212 = vshrl.u32 %v2211, 7
        %v2213 = vsub.s32 5, %v2212
        %v2214 = vrot.slane %v2189, %v2213
        %v2215 = vlaneseq
        %v2216 = vshrl.u32 %v2215, 7
        %v2217 = vsub.s32 6, %v2216
        %v2218 = vrot.slane %v2189, %v2217
        %v2354 = vunpack.c.l.b16 %v2061
        %v2355 = vunpack.c.h.b16 %v2061
        %v2356 = vunpack.c.l.b16 %v2062
        %v2357 = vunpack.c.h.b16 %v2062
        %v2358 = vunpack.c.l.b16 %v2063
        %v2359 = vunpack.c.h.b16 %v2063
        %v2360 = vunpack.c.l.b16 %v2064
        %v2361 = vunpack.c.l.b16 %v2065
        %v2362 = vunpack.c.h.b16 %v2065
        %v2363 = vunpack.c.l.b16 %v2066
        %v2364 = vunpack.c.h.b16 %v2066
        %v2365 = vunpack.c.l.b16 %v2067
        %v2366 = vunpack.c.h.b16 %v2067
        %v2367 = vunpack.c.l.b16 %v2068
        %v2368 = vunpack.c.l.b16 %v2069
        %v2369 = vunpack.c.h.b16 %v2069
        %v2370 = vunpack.c.l.b16 %v2070
        %v2371 = vunpack.c.h.b16 %v2070
        %v2372 = vunpack.c.l.b16 %v2071
        %v2373 = vunpack.c.h.b16 %v2071
        %v2374 = vunpack.c.l.b16 %v2072
        %v2375 = vunpack.c.l.b16 %v2073
        %v2376 = vunpack.c.h.b16 %v2073
        %v2377 = vunpack.c.l.b16 %v2074
        %v2378 = vunpack.c.h.b16 %v2074
        %v2379 = vunpack.c.l.b16 %v2075
        %v2380 = vunpack.c.h.b16 %v2075
        %v2381 = vunpack.c.l.b16 %v2076
        %v2382 = vunpack.c.l.b16 %v2077
        %v2383 = vunpack.c.h.b16 %v2077
        %v2384 = vunpack.c.l.b16 %v2078
        %v2385 = vunpack.c.h.b16 %v2078
        %v2386 = vunpack.c.l.b16 %v2079
        %v2387 = vunpack.c.h.b16 %v2079
        %v2388 = vunpack.c.l.b16 %v2080
        %v2389 = vunpack.c.l.b16 %v2081
        %v2390 = vunpack.c.h.b16 %v2081
        %v2391 = vunpack.c.l.b16 %v2082
        %v2392 = vunpack.c.h.b16 %v2082
        %v2393 = vunpack.c.l.b16 %v2083
        %v2394 = vunpack.c.h.b16 %v2083
        %v2395 = vunpack.c.l.b16 %v2084
        %v2396 = vunpack.c.l.b16 %v2085
        %v2397 = vunpack.c.h.b16 %v2085
        %v2398 = vunpack.c.l.b16 %v2086
        %v2399 = vunpack.c.h.b16 %v2086
        %v2400 = vunpack.c.l.b16 %v2087
        %v2401 = vunpack.c.h.b16 %v2087
        %v2402 = vunpack.c.l.b16 %v2088
        %v2403 = vunpack.c.l.b16 %v2089
        %v2404 = vunpack.c.h.b16 %v2089
        %v2405 = vunpack.c.l.b16 %v2090
        %v2406 = vunpack.c.h.b16 %v2090
        %v2407 = vunpack.c.l.b16 %v2091
        %v2408 = vunpack.c.h.b16 %v2091
        %v2409 = vunpack.c.l.b16 %v2092
        %v2410 = vunpack.c.l.b16 %v2093
        %v2411 = vunpack.c.h.b16 %v2093
        %v2412 = vunpack.c.l.b16 %v2094
        %v2413 = vunpack.c.h.b16 %v2094
        %v2414 = vunpack.c.l.b16 %v2095
        %v2415 = vunpack.c.h.b16 %v2095
        %v2416 = vunpack.c.l.b16 %v2096
        %v2417 = vunpack.c.l.b16 %v2097
        %v2418 = vunpack.c.h.b16 %v2097
        %v2419 = vunpack.c.l.b16 %v2098
        %v2420 = vunpack.c.h.b16 %v2098
        %v2421 = vunpack.c.l.b16 %v2099
        %v2422 = vunpack.c.h.b16 %v2099
        %v2423 = vunpack.c.l.b16 %v2100
        %v2424 = vunpack.c.l.b16 %v2101
        %v2425 = vunpack.c.h.b16 %v2101
        %v2426 = vunpack.c.l.b16 %v2102
        %v2427 = vunpack.c.h.b16 %v2102
        %v2428 = vunpack.c.l.b16 %v2103
        %v2429 = vunpack.c.h.b16 %v2103
        %v2430 = vunpack.c.l.b16 %v2104
        %v2431 = vunpack.c.l.b16 %v2105
        %v2432 = vunpack.c.h.b16 %v2105
        %v2433 = vunpack.c.l.b16 %v2106
        %v2434 = vunpack.c.h.b16 %v2106
        %v2435 = vunpack.c.l.b16 %v2107
        %v2436 = vunpack.c.h.b16 %v2107
        %v2437 = vunpack.c.l.b16 %v2108
        %v2438 = vunpack.c.l.b16 %v2109
        %v2439 = vunpack.c.h.b16 %v2109
        %v2440 = vunpack.c.l.b16 %v2110
        %v2441 = vunpack.c.h.b16 %v2110
        %v2442 = vunpack.c.l.b16 %v2111
        %v2443 = vunpack.c.h.b16 %v2111
        %v2444 = vunpack.c.l.b16 %v2112
        %v2445 = vunpack.c.l.b16 %v2113
        %v2446 = vunpack.c.h.b16 %v2113
        %v2447 = vunpack.c.l.b16 %v2114
        %v2448 = vunpack.c.h.b16 %v2114
        %v2449 = vunpack.c.l.b16 %v2115
        %v2450 = vunpack.c.h.b16 %v2115
        %v2451 = vunpack.c.l.b16 %v2116
        %v2452 = vunpack.c.l.b16 %v2117
        %v2453 = vunpack.c.h.b16 %v2117
        %v2454 = vunpack.c.l.b16 %v2118
        %v2455 = vunpack.c.h.b16 %v2118
        %v2456 = vunpack.c.l.b16 %v2119
        %v2457 = vunpack.c.h.b16 %v2119
        %v2458 = vunpack.c.l.b16 %v2120
        %v2459 = vunpack.c.l.b16 %v2121
        %v2460 = vunpack.c.h.b16 %v2121
        %v2461 = vunpack.c.l.b16 %v2122
        %v2462 = vunpack.c.h.b16 %v2122
        %v2463 = vunpack.c.l.b16 %v2123
        %v2464 = vunpack.c.h.b16 %v2123
        %v2465 = vunpack.c.l.b16 %v2124
        %v2466 = vunpack.c.l.b16 %v2125
        %v2467 = vunpack.c.h.b16 %v2125
        %v2468 = vunpack.c.l.b16 %v2126
        %v2469 = vunpack.c.h.b16 %v2126
        %v2470 = vunpack.c.l.b16 %v2127
        %v2471 = vunpack.c.h.b16 %v2127
        %v2472 = vunpack.c.l.b16 %v2128
        %v2473 = vunpack.c.l.b16 %v2129
        %v2474 = vunpack.c.h.b16 %v2129
        %v2475 = vunpack.c.l.b16 %v2130
        %v2476 = vunpack.c.h.b16 %v2130
        %v2477 = vunpack.c.l.b16 %v2131
        %v2478 = vunpack.c.h.b16 %v2131
        %v2479 = vunpack.c.l.b16 %v2132
        %v2480 = vunpack.c.l.b16 %v2133
        %v2481 = vunpack.c.h.b16 %v2133
        %v2482 = vunpack.c.l.b16 %v2134
        %v2483 = vunpack.c.h.b16 %v2134
        %v2484 = vunpack.c.l.b16 %v2135
        %v2485 = vunpack.c.h.b16 %v2135
        %v2486 = vunpack.c.l.b16 %v2136
        %v2487 = vunpack.c.l.b16 %v2137
        %v2488 = vunpack.c.h.b16 %v2137
        %v2489 = vunpack.c.l.b16 %v2138
        %v2490 = vunpack.c.h.b16 %v2138
        %v2491 = vunpack.c.l.b16 %v2139
        %v2492 = vunpack.c.h.b16 %v2139
        %v2493 = vunpack.c.l.b16 %v2140
        %v2494 = vunpack.c.l.b16 %v2141
        %v2495 = vunpack.c.h.b16 %v2141
        %v2496 = vunpack.c.l.b16 %v2142
        %v2497 = vunpack.c.h.b16 %v2142
        %v2498 = vunpack.c.l.b16 %v2143
        %v2499 = vunpack.c.h.b16 %v2143
        %v2500 = vunpack.c.l.b16 %v2144
        %v2501 = vunpack.c.l.b16 %v2145
        %v2502 = vunpack.c.h.b16 %v2145
        %v2503 = vunpack.c.l.b16 %v2146
        %v2504 = vunpack.c.h.b16 %v2146
        %v2505 = vunpack.c.l.b16 %v2147
        %v2506 = vunpack.c.h.b16 %v2147
        %v2507 = vunpack.c.l.b16 %v2148
        %v2508 = vunpack.c.l.b16 %v2149
        %v2509 = vunpack.c.h.b16 %v2149
        %v2510 = vunpack.c.l.b16 %v2150
        %v2511 = vunpack.c.h.b16 %v2150
        %v2512 = vunpack.c.l.b16 %v2151
        %v2513 = vunpack.c.h.b16 %v2151
        %v2514 = vunpack.c.l.b16 %v2152
        %v2515 = vunpack.c.l.b16 %v2153
        %v2516 = vunpack.c.h.b16 %v2153
        %v2517 = vunpack.c.l.b16 %v2154
        %v2518 = vunpack.c.h.b16 %v2154
        %v2519 = vunpack.c.l.b16 %v2155
        %v2520 = vunpack.c.h.b16 %v2155
        %v2521 = vunpack.c.l.b16 %v2156
        %v2522 = vunpack.c.l.b16 %v2157
        %v2523 = vunpack.c.h.b16 %v2157
        %v2524 = vunpack.c.l.b16 %v2158
        %v2525 = vunpack.c.h.b16 %v2158
        %v2526 = vunpack.c.l.b16 %v2159
        %v2527 = vunpack.c.h.b16 %v2159
        %v2528 = vunpack.c.l.b16 %v2160
        %v2529 = vunpack.c.l.b16 %v2161
        %v2530 = vunpack.c.h.b16 %v2161
        %v2531 = vunpack.c.l.b16 %v2162
        %v2532 = vunpack.c.h.b16 %v2162
        %v2533 = vunpack.c.l.b16 %v2163
        %v2534 = vunpack.c.h.b16 %v2163
        %v2535 = vunpack.c.l.b16 %v2164
        %v2536 = vunpack.c.l.b16 %v2165
        %v2537 = vunpack.c.h.b16 %v2165
        %v2538 = vunpack.c.l.b16 %v2166
        %v2539 = vunpack.c.h.b16 %v2166
        %v2540 = vunpack.c.l.b16 %v2167
        %v2541 = vunpack.c.h.b16 %v2167
        %v2542 = vunpack.c.l.b16 %v2168
        %v2543 = vunpack.c.l.b16 %v2169
        %v2544 = vunpack.c.h.b16 %v2169
        %v2545 = vunpack.c.l.b16 %v2170
        %v2546 = vunpack.c.h.b16 %v2170
        %v2547 = vunpack.c.l.b16 %v2171
        %v2548 = vunpack.c.h.b16 %v2171
        %v2549 = vunpack.c.l.b16 %v2172
        %v2550 = vunpack.c.l.b16 %v2173
        %v2551 = vunpack.c.h.b16 %v2173
        %v2552 = vunpack.c.l.b16 %v2174
        %v2553 = vunpack.c.h.b16 %v2174
        %v2554 = vunpack.c.l.b16 %v2175
        %v2555 = vunpack.c.h.b16 %v2175
        %v2556 = vunpack.c.l.b16 %v2176
        %v2557 = vunpack.c.l.b16 %v2177
        %v2558 = vunpack.c.h.b16 %v2177
        %v2559 = vunpack.c.l.b16 %v2178
        %v2560 = vunpack.c.h.b16 %v2178
        %v2561 = vunpack.c.l.b16 %v2179
        %v2562 = vunpack.c.h.b16 %v2179
        %v2563 = vunpack.c.l.b16 %v2180
        %v2564 = vunpack.c.l.b16 %v2181
        %v2565 = vunpack.c.h.b16 %v2181
        %v2566 = vunpack.c.l.b16 %v2182
        %v2567 = vunpack.c.h.b16 %v2182
        %v2568 = vunpack.c.l.b16 %v2183
        %v2569 = vunpack.c.h.b16 %v2183
        %v2570 = vunpack.c.l.b16 %v2184
        %v2571 = vunpack.c.l.b16 %v2185
        %v2572 = vunpack.c.h.b16 %v2185
        %v2573 = vunpack.c.l.b16 %v2186
        %v2574 = vunpack.c.h.b16 %v2186
        %v2575 = vunpack.c.l.b16 %v2187
        %v2576 = vunpack.c.h.b16 %v2187
        %v2577 = vunpack.c.l.b16 %v2188
        %v2578 = vpack.c.b16 %v2361, %v2354
        %v2579 = vpack.c.b16 %v2362, %v2355
        %v2580 = vpack.c.b16 %v2363, %v2356
        %v2581 = vpack.c.b16 %v2364, %v2357
        %v2582 = vpack.c.b16 %v2365, %v2358
        %v2583 = vpack.c.b16 %v2366, %v2359
        %v2584 = vpack.c.b16 %v2367, %v2360
        %v2585 = vpack.c.b16 %v2375, %v2368
        %v2586 = vpack.c.b16 %v2376, %v2369
        %v2587 = vpack.c.b16 %v2377, %v2370
        %v2588 = vpack.c.b16 %v2378, %v2371
        %v2589 = vpack.c.b16 %v2379, %v2372
        %v2590 = vpack.c.b16 %v2380, %v2373
        %v2591 = vpack.c.b16 %v2381, %v2374
        %v2592 = vpack.c.b16 %v2389, %v2382
        %v2593 = vpack.c.b16 %v2390, %v2383
        %v2594 = vpack.c.b16 %v2391, %v2384
        %v2595 = vpack.c.b16 %v2392, %v2385
        %v2596 = vpack.c.b16 %v2393, %v2386
        %v2597 = vpack.c.b16 %v2394, %v2387
        %v2598 = vpack.c.b16 %v2395, %v2388
        %v2599 = vpack.c.b16 %v2403, %v2396
        %v2600 = vpack.c.b16 %v2404, %v2397
        %v2601 = vpack.c.b16 %v2405, %v2398
        %v2602 = vpack.c.b16 %v2406, %v2399
        %v2603 = vpack.c.b16 %v2407, %v2400
        %v2604 = vpack.c.b16 %v2408, %v2401
        %v2605 = vpack.c.b16 %v2409, %v2402
        %v2606 = vpack.c.b16 %v2417, %v2410
        %v2607 = vpack.c.b16 %v2418, %v2411
        %v2608 = vpack.c.b16 %v2419, %v2412
        %v2609 = vpack.c.b16 %v2420, %v2413
        %v2610 = vpack.c.b16 %v2421, %v2414
        %v2611 = vpack.c.b16 %v2422, %v2415
        %v2612 = vpack.c.b16 %v2423, %v2416
        %v2613 = vpack.c.b16 %v2431, %v2424
        %v2614 = vpack.c.b16 %v2432, %v2425
        %v2615 = vpack.c.b16 %v2433, %v2426
        %v2616 = vpack.c.b16 %v2434, %v2427
        %v2617 = vpack.c.b16 %v2435, %v2428
        %v2618 = vpack.c.b16 %v2436, %v2429
        %v2619 = vpack.c.b16 %v2437, %v2430
        %v2620 = vpack.c.b16 %v2445, %v2438
        %v2621 = vpack.c.b16 %v2446, %v2439
        %v2622 = vpack.c.b16 %v2447, %v2440
        %v2623 = vpack.c.b16 %v2448, %v2441
        %v2624 = vpack.c.b16 %v2449, %v2442
        %v2625 = vpack.c.b16 %v2450, %v2443
        %v2626 = vpack.c.b16 %v2451, %v2444
        %v2627 = vpack.c.b16 %v2459, %v2452
        %v2628 = vpack.c.b16 %v2460, %v2453
        %v2629 = vpack.c.b16 %v2461, %v2454
        %v2630 = vpack.c.b16 %v2462, %v2455
        %v2631 = vpack.c.b16 %v2463, %v2456
        %v2632 = vpack.c.b16 %v2464, %v2457
        %v2633 = vpack.c.b16 %v2465, %v2458
        %v2634 = vpack.c.b16 %v2473, %v2466
        %v2635 = vpack.c.b16 %v2474, %v2467
        %v2636 = vpack.c.b16 %v2475, %v2468
        %v2637 = vpack.c.b16 %v2476, %v2469
        %v2638 = vpack.c.b16 %v2477, %v2470
        %v2639 = vpack.c.b16 %v2478, %v2471
        %v2640 = vpack.c.b16 %v2479, %v2472
        %v2641 = vpack.c.b16 %v2487, %v2480
        %v2642 = vpack.c.b16 %v2488, %v2481
        %v2643 = vpack.c.b16 %v2489, %v2482
        %v2644 = vpack.c.b16 %v2490, %v2483
        %v2645 = vpack.c.b16 %v2491, %v2484
        %v2646 = vpack.c.b16 %v2492, %v2485
        %v2647 = vpack.c.b16 %v2493, %v2486
        %v2648 = vpack.c.b16 %v2501, %v2494
        %v2649 = vpack.c.b16 %v2502, %v2495
        %v2650 = vpack.c.b16 %v2503, %v2496
        %v2651 = vpack.c.b16 %v2504, %v2497
        %v2652 = vpack.c.b16 %v2505, %v2498
        %v2653 = vpack.c.b16 %v2506, %v2499
        %v2654 = vpack.c.b16 %v2507, %v2500
        %v2655 = vpack.c.b16 %v2515, %v2508
        %v2656 = vpack.c.b16 %v2516, %v2509
        %v2657 = vpack.c.b16 %v2517, %v2510
        %v2658 = vpack.c.b16 %v2518, %v2511
        %v2659 = vpack.c.b16 %v2519, %v2512
        %v2660 = vpack.c.b16 %v2520, %v2513
        %v2661 = vpack.c.b16 %v2521, %v2514
        %v2662 = vpack.c.b16 %v2529, %v2522
        %v2663 = vpack.c.b16 %v2530, %v2523
        %v2664 = vpack.c.b16 %v2531, %v2524
        %v2665 = vpack.c.b16 %v2532, %v2525
        %v2666 = vpack.c.b16 %v2533, %v2526
        %v2667 = vpack.c.b16 %v2534, %v2527
        %v2668 = vpack.c.b16 %v2535, %v2528
        %v2669 = vpack.c.b16 %v2543, %v2536
        %v2670 = vpack.c.b16 %v2544, %v2537
        %v2671 = vpack.c.b16 %v2545, %v2538
        %v2672 = vpack.c.b16 %v2546, %v2539
        %v2673 = vpack.c.b16 %v2547, %v2540
        %v2674 = vpack.c.b16 %v2548, %v2541
        %v2675 = vpack.c.b16 %v2549, %v2542
        %v2676 = vpack.c.b16 %v2557, %v2550
        %v2677 = vpack.c.b16 %v2558, %v2551
        %v2678 = vpack.c.b16 %v2559, %v2552
        %v2679 = vpack.c.b16 %v2560, %v2553
        %v2680 = vpack.c.b16 %v2561, %v2554
        %v2681 = vpack.c.b16 %v2562, %v2555
        %v2682 = vpack.c.b16 %v2563, %v2556
        %v2683 = vpack.c.b16 %v2571, %v2564
        %v2684 = vpack.c.b16 %v2572, %v2565
        %v2685 = vpack.c.b16 %v2573, %v2566
        %v2686 = vpack.c.b16 %v2574, %v2567
        %v2687 = vpack.c.b16 %v2575, %v2568
        %v2688 = vpack.c.b16 %v2576, %v2569
        %v2689 = vpack.c.b16 %v2577, %v2570
        %2802 = vmatprep.subr.bf16.mxu0 %v2628
        %2803 = vmatpush1.bf16.msra.mxu0 %v2627
        %2804 = vmatprep.subr.bf16.mxu0 %v2621
        %2805 = vmatpush1.bf16.msra.mxu0 %v2620
        %2806 = vmatprep.subr.bf16.mxu0 %v2614
        %2807 = vmatpush1.bf16.msra.mxu0 %v2613
        %2808 = vmatprep.subr.bf16.mxu0 %v2607
        %2809 = vmatpush1.bf16.msra.mxu0 %v2606
        %2810 = vmatprep.subr.bf16.mxu0 %v2600
        %2811 = vmatpush1.bf16.msra.mxu0 %v2599
        %2812 = vmatprep.subr.bf16.mxu0 %v2593
        %2813 = vmatpush1.bf16.msra.mxu0 %v2592
        %2814 = vmatprep.subr.bf16.mxu0 %v2586
        %2815 = vmatpush1.bf16.msra.mxu0 %v2585
        %2816 = vmatprep.subr.bf16.mxu0 %v2579
        %2817 = vmatpush1.bf16.msra.mxu0 %v2578
        %2818 = vmatprep.subr.bf16.mxu0 %v2684
        %2819 = vmatpush2.bf16.msra.mxu0 %v2683
        %2820 = vmatprep.subr.bf16.mxu0 %v2677
        %2821 = vmatpush2.bf16.msra.mxu0 %v2676
        %2822 = vmatprep.subr.bf16.mxu0 %v2670
        %2823 = vmatpush2.bf16.msra.mxu0 %v2669
        %2824 = vmatprep.subr.bf16.mxu0 %v2663
        %2825 = vmatpush2.bf16.msra.mxu0 %v2662
        %2826 = vmatprep.subr.bf16.mxu0 %v2656
        %2827 = vmatpush2.bf16.msra.mxu0 %v2655
        %2828 = vmatprep.subr.bf16.mxu0 %v2649
        %2829 = vmatpush2.bf16.msra.mxu0 %v2648
        %2830 = vmatprep.subr.bf16.mxu0 %v2642
        %2831 = vmatpush2.bf16.msra.mxu0 %v2641
        %2832 = vmatprep.subr.bf16.mxu0 %v2635
        %2833 = vmatpush2.bf16.msra.mxu0 %v2634
        %2834 = vmatprep.mubr.bf16.mxu0 %v2060
        %2835 = vmatmul.mubr.bf16.gmra.mxu0 %v2059
        %v2836 = vpop.f32.mrf.mxu0
        %v2837 = vadd.f32 %v2194, %v2836
        %v2838 = vpop.f32.mrf.mxu0
        %v2839 = vadd.f32 %v2198, %v2838
        %v2840 = vpop.f32.mrf.mxu0
        %v2841 = vadd.f32 %v2194, %v2840
        %v2842 = vpop.f32.mrf.mxu0
        %v2843 = vadd.f32 %v2198, %v2842
        %2844 = vdwg.mxu0
        %2845 = vmatprep.subr.bf16.mxu0 %v2630
        %2846 = vmatpush1.bf16.msra.mxu0 %v2629
        %2847 = vmatprep.subr.bf16.mxu0 %v2623
        %2848 = vmatpush1.bf16.msra.mxu0 %v2622
        %2849 = vmatprep.subr.bf16.mxu0 %v2616
        %2850 = vmatpush1.bf16.msra.mxu0 %v2615
        %2851 = vmatprep.subr.bf16.mxu0 %v2609
        %2852 = vmatpush1.bf16.msra.mxu0 %v2608
        %2853 = vmatprep.subr.bf16.mxu0 %v2602
        %2854 = vmatpush1.bf16.msra.mxu0 %v2601
        %2855 = vmatprep.subr.bf16.mxu0 %v2595
        %2856 = vmatpush1.bf16.msra.mxu0 %v2594
        %2857 = vmatprep.subr.bf16.mxu0 %v2588
        %2858 = vmatpush1.bf16.msra.mxu0 %v2587
        %2859 = vmatprep.subr.bf16.mxu0 %v2581
        %2860 = vmatpush1.bf16.msra.mxu0 %v2580
        %2861 = vmatprep.subr.bf16.mxu0 %v2686
        %2862 = vmatpush2.bf16.msra.mxu0 %v2685
        %2863 = vmatprep.subr.bf16.mxu0 %v2679
        %2864 = vmatpush2.bf16.msra.mxu0 %v2678
        %2865 = vmatprep.subr.bf16.mxu0 %v2672
        %2866 = vmatpush2.bf16.msra.mxu0 %v2671
        %2867 = vmatprep.subr.bf16.mxu0 %v2665
        %2868 = vmatpush2.bf16.msra.mxu0 %v2664
        %2869 = vmatprep.subr.bf16.mxu0 %v2658
        %2870 = vmatpush2.bf16.msra.mxu0 %v2657
        %2871 = vmatprep.subr.bf16.mxu0 %v2651
        %2872 = vmatpush2.bf16.msra.mxu0 %v2650
        %2873 = vmatprep.subr.bf16.mxu0 %v2644
        %2874 = vmatpush2.bf16.msra.mxu0 %v2643
        %2875 = vmatprep.subr.bf16.mxu0 %v2637
        %2876 = vmatpush2.bf16.msra.mxu0 %v2636
        %2877 = vmatprep.mubr.bf16.mxu0 %v2060
        %2878 = vmatmul.mubr.bf16.gmra.mxu0 %v2059
        %v2879 = vpop.f32.mrf.mxu0
        %v2880 = vadd.f32 %v2202, %v2879
        %v2881 = vpop.f32.mrf.mxu0
        %v2882 = vadd.f32 %v2206, %v2881
        %v2883 = vpop.f32.mrf.mxu0
        %v2884 = vadd.f32 %v2202, %v2883
        %v2885 = vpop.f32.mrf.mxu0
        %v2886 = vadd.f32 %v2206, %v2885
        %2887 = vdwg.mxu0
        %2888 = vmatprep.subr.bf16.mxu0 %v2632
        %2889 = vmatpush1.bf16.msra.mxu0 %v2631
        %2890 = vmatprep.subr.bf16.mxu0 %v2625
        %2891 = vmatpush1.bf16.msra.mxu0 %v2624
        %2892 = vmatprep.subr.bf16.mxu0 %v2618
        %2893 = vmatpush1.bf16.msra.mxu0 %v2617
        %2894 = vmatprep.subr.bf16.mxu0 %v2611
        %2895 = vmatpush1.bf16.msra.mxu0 %v2610
        %2896 = vmatprep.subr.bf16.mxu0 %v2604
        %2897 = vmatpush1.bf16.msra.mxu0 %v2603
        %2898 = vmatprep.subr.bf16.mxu0 %v2597
        %2899 = vmatpush1.bf16.msra.mxu0 %v2596
        %2900 = vmatprep.subr.bf16.mxu0 %v2590
        %2901 = vmatpush1.bf16.msra.mxu0 %v2589
        %2902 = vmatprep.subr.bf16.mxu0 %v2583
        %2903 = vmatpush1.bf16.msra.mxu0 %v2582
        %2904 = vmatprep.subr.bf16.mxu0 %v2688
        %2905 = vmatpush2.bf16.msra.mxu0 %v2687
        %2906 = vmatprep.subr.bf16.mxu0 %v2681
        %2907 = vmatpush2.bf16.msra.mxu0 %v2680
        %2908 = vmatprep.subr.bf16.mxu0 %v2674
        %2909 = vmatpush2.bf16.msra.mxu0 %v2673
        %2910 = vmatprep.subr.bf16.mxu0 %v2667
        %2911 = vmatpush2.bf16.msra.mxu0 %v2666
        %2912 = vmatprep.subr.bf16.mxu0 %v2660
        %2913 = vmatpush2.bf16.msra.mxu0 %v2659
        %2914 = vmatprep.subr.bf16.mxu0 %v2653
        %2915 = vmatpush2.bf16.msra.mxu0 %v2652
        %2916 = vmatprep.subr.bf16.mxu0 %v2646
        %2917 = vmatpush2.bf16.msra.mxu0 %v2645
        %2918 = vmatprep.subr.bf16.mxu0 %v2639
        %2919 = vmatpush2.bf16.msra.mxu0 %v2638
        %2920 = vmatprep.mubr.bf16.mxu0 %v2060
        %2921 = vmatmul.mubr.bf16.gmra.mxu0 %v2059
        %v2922 = vpop.f32.mrf.mxu0
        %v2923 = vadd.f32 %v2210, %v2922
        %v2924 = vpop.f32.mrf.mxu0
        %v2925 = vadd.f32 %v2214, %v2924
        %v2926 = vpop.f32.mrf.mxu0
        %v2927 = vadd.f32 %v2210, %v2926
        %v2928 = vpop.f32.mrf.mxu0
        %v2929 = vadd.f32 %v2214, %v2928
        %2930 = vdwg.mxu0
        %2931 = vmatprep.subr.bf16.mxu0 0
        %2932 = vmatpush1.bf16.msra.mxu0 %v2633
        %2933 = vmatprep.subr.bf16.mxu0 0
        %2934 = vmatpush1.bf16.msra.mxu0 %v2626
        %2935 = vmatprep.subr.bf16.mxu0 0
        %2936 = vmatpush1.bf16.msra.mxu0 %v2619
        %2937 = vmatprep.subr.bf16.mxu0 0
        %2938 = vmatpush1.bf16.msra.mxu0 %v2612
        %2939 = vmatprep.subr.bf16.mxu0 0
        %2940 = vmatpush1.bf16.msra.mxu0 %v2605
        %2941 = vmatprep.subr.bf16.mxu0 0
        %2942 = vmatpush1.bf16.msra.mxu0 %v2598
        %2943 = vmatprep.subr.bf16.mxu0 0
        %2944 = vmatpush1.bf16.msra.mxu0 %v2591
        %2945 = vmatprep.subr.bf16.mxu0 0
        %2946 = vmatpush1.bf16.msra.mxu0 %v2584
        %2947 = vmatprep.subr.bf16.mxu0 0
        %2948 = vmatpush2.bf16.msra.mxu0 %v2689
        %2949 = vmatprep.subr.bf16.mxu0 0
        %2950 = vmatpush2.bf16.msra.mxu0 %v2682
        %2951 = vmatprep.subr.bf16.mxu0 0
        %2952 = vmatpush2.bf16.msra.mxu0 %v2675
        %2953 = vmatprep.subr.bf16.mxu0 0
        %2954 = vmatpush2.bf16.msra.mxu0 %v2668
        %2955 = vmatprep.subr.bf16.mxu0 0
        %2956 = vmatpush2.bf16.msra.mxu0 %v2661
        %2957 = vmatprep.subr.bf16.mxu0 0
        %2958 = vmatpush2.bf16.msra.mxu0 %v2654
        %2959 = vmatprep.subr.bf16.mxu0 0
        %2960 = vmatpush2.bf16.msra.mxu0 %v2647
        %2961 = vmatprep.subr.bf16.mxu0 0
        %2962 = vmatpush2.bf16.msra.mxu0 %v2640
        %2963 = vmatprep.mubr.bf16.mxu0 %v2060
        %2964 = vmatmul.mubr.bf16.gmra.mxu0 %v2059
        %v2965 = vpop.f32.mrf.mxu0
        %v2966 = vadd.f32 %v2218, %v2965
        %v2967 = vpop.f32.mrf.mxu0
        %v2968 = vpop.f32.mrf.mxu0
        %v2969 = vadd.f32 %v2218, %v2968
        %v2970 = vpop.f32.mrf.mxu0
        %2971 = vdwg.mxu0
        %v2972 = vpack.c.bf16 %v2841, %v2837
        %v2973 = vpack.c.bf16 %v2843, %v2839
        %v2974 = vpack.c.bf16 %v2884, %v2880
        %v2975 = vpack.c.bf16 %v2886, %v2882
        %v2976 = vpack.c.bf16 %v2927, %v2923
        %v2977 = vpack.c.bf16 %v2929, %v2925
        %v2978 = vpack.c.bf16 %v2969, %v2966
        %v2979 = vmul.bf16 %v2972, 1056980736
        %v2980 = vmul.bf16 %v2973, 1056980736
        %v2981 = vmul.bf16 %v2974, 1056980736
        %v2982 = vmul.bf16 %v2975, 1056980736
        %v2983 = vmul.bf16 %v2976, 1056980736
        %v2984 = vmul.bf16 %v2977, 1056980736
        %v2985 = vmul.bf16 %v2978, 1056980736
        %v2986 = vtanh.bf16.pop %v2979
        %v2987 = vtanh.bf16.pop %v2980
        %v2988 = vtanh.bf16.pop %v2981
        %v2989 = vtanh.bf16.pop %v2982
        %v2990 = vtanh.bf16.pop %v2983
        %v2991 = vtanh.bf16.pop %v2984
        %v2992 = vtanh.bf16.pop %v2985
        %v2993 = vadd.bf16 %v2986, 1065369472
        %v2994 = vadd.bf16 %v2987, 1065369472
        %v2995 = vadd.bf16 %v2988, 1065369472
        %v2996 = vadd.bf16 %v2989, 1065369472
        %v2997 = vadd.bf16 %v2990, 1065369472
        %v2998 = vadd.bf16 %v2991, 1065369472
        %v2999 = vadd.bf16 %v2992, 1065369472
        %v3000 = vmul.bf16 %v2993, 1056980736
        %v3001 = vmul.bf16 %v2994, 1056980736
        %v3002 = vmul.bf16 %v2995, 1056980736
        %v3003 = vmul.bf16 %v2996, 1056980736
        %v3004 = vmul.bf16 %v2997, 1056980736
        %v3005 = vmul.bf16 %v2998, 1056980736
        %v3006 = vmul.bf16 %v2999, 1056980736
        %v3014 = vunpack.c.l.b16 %v3000
        %v3015 = vunpack.c.l.b16 %v3001
        %v3016 = vunpack.c.l.b16 %v3002
        %v3017 = vunpack.c.l.b16 %v3003
        %v3018 = vunpack.c.l.b16 %v3004
        %v3019 = vunpack.c.l.b16 %v3005
        %v3020 = vunpack.c.l.b16 %v3006
        %v3021 = vunpack.c.h.b16 %v3000
        %v3022 = vunpack.c.h.b16 %v3001
        %v3023 = vunpack.c.h.b16 %v3002
        %v3024 = vunpack.c.h.b16 %v3003
        %v3025 = vunpack.c.h.b16 %v3004
        %v3026 = vunpack.c.h.b16 %v3005
        %v3027 = vunpack.c.h.b16 %v3006
        %v3028 = vpack.c.b16 %v3015, %v3014
        %v3029 = vpack.c.b16 %v3017, %v3016
        %v3030 = vpack.c.b16 %v3019, %v3018
        %v3031 = vpack.c.b16 %v3020, %v3020
        %v3032 = vpack.c.b16 %v3022, %v3021
        %v3033 = vpack.c.b16 %v3024, %v3023
        %v3034 = vpack.c.b16 %v3026, %v3025
        %v3035 = vpack.c.b16 %v3027, %v3027
        %3044 = vst [vmem:[%s591] sm:$0xff] %v3028
        %3045 = vst [vmem:[%s591 + $0x8] sm:$0xff] %v3029
        %3046 = vst [vmem:[%s591 + $0x10] sm:$0xff] %v3030
        %3047 = vst [vmem:[%s591 + $0x18] sm:$0xf] %v3031
        %3048 = vst [vmem:[%s591 + $0x1c] sm:$0xff] %v3032
        %3049 = vst [vmem:[%s591 + $0x24] sm:$0xff] %v3033
        %3050 = vst [vmem:[%s591 + $0x2c] sm:$0xff] %v3034
        %3051 = vst [vmem:[%s591 + $0x34] sm:$0xf] %v3035
        %s3052 = sand.u32 %s350, 1
        %s3053 = scalar_lea.sflag [#allocation4], %s3052
        %s3054 = sand.u32 %s350, 1
        %s3055 = smul.addr %s3054, 56
        %s3056 = scalar_lea.vmem [#allocation11], %s3055
        %s3057 = sand.u32 %s376, 1
        %s3058 = scalar_lea.sflag [#allocation13], %s3057
        %s3059 = sand.u32 %s376, 1
        %s3060 = smul.addr %s3059, 16
        %s3061 = scalar_lea.vmem [#allocation12], %s3060
        // Predicated region
        $region97: #{tpu_custom_call.1} parent=75 // pred_check
          %p3062 = pneg %p360
        $region98: #{tpu_custom_call.1} parent=75 // pred_check_branch
          %3064 = sbr.rel (%p3062) target = $region100
        $region99: #{tpu_custom_call.1} parent=75 // pred_region
          %s3065 = smul.u32 2, %s38
          %s3067 = ssub.s32 896, 896
          %3068 = vsyncadd %s3053, %s3067
          %s3069 = smul.addr %s3065, 7
          %s3070 = smul.addr %s3069, 64
          %s3071 = scalar_lea.hbm %s14, %s3070
          %s3072 = sshll.u32 %s3056, 4
          %s3073 = int_to_ptr.vmem [resolvable:$true] %s3072
          %3078 = dma.vmem_to_hbm [thread:$0]  %s3073, 896, %s3071, %s3053, 448, 448, 28
        $region100: #{tpu_custom_call.1} parent=75 // pred_fallthru
          _
        // Predicated region
        $region101: #{tpu_custom_call.1} parent=75 // pred_check
          %p3079 = pneg %p386
        $region102: #{tpu_custom_call.1} parent=75 // pred_check_branch
          %3081 = sbr.rel (%p3079) target = $region104
        $region103: #{tpu_custom_call.1} parent=75 // pred_region
          %s3082 = smul.u32 2, %s38
          %s3084 = ssub.s32 256, 256
          %3085 = vsyncadd %s3058, %s3084
          %s3086 = smul.addr %s3082, 128
          %s3087 = scalar_lea.hbm %s15, %s3086
          %s3088 = sshll.u32 %s3061, 4
          %s3089 = int_to_ptr.vmem [resolvable:$true] %s3088
          %3094 = dma.vmem_to_hbm [thread:$0]  %s3089, 256, %s3087, %s3058, 128, 128, 8
        $region104: #{tpu_custom_call.1} parent=75 // pred_fallthru
          _
      $region76: #{tpu_custom_call.1} parent=5 // pred_fallthru
        _
      %p3095 = scmp.le.s32.totalorder 2, %s33
      // Predicated region
      $region105: #{tpu_custom_call.1} parent=5 // pred_check
        %p3096 = pneg %p3095
      $region106: #{tpu_custom_call.1} parent=5 // pred_check_branch
        %3098 = sbr.rel (%p3096) target = $region108
      $region107: #{tpu_custom_call.1} parent=5 // pred_region
        %s3099 = ssub.s32 %s33, 2
        // Predicated region
        $region109: #{tpu_custom_call.1} parent=107 // pred_check
          %p3100 = pneg %p366
        $region110: #{tpu_custom_call.1} parent=107 // pred_check_branch
          %3102 = sbr.rel (%p3100) target = $region112
        $region111: #{tpu_custom_call.1} parent=107 // pred_region
          %s3103 = sand.u32 %s351, 1
          %s3104 = scalar_lea.sflag [#allocation4], %s3103
          %s3105 = sand.u32 %s351, 1
          %s3106 = smul.addr %s3105, 56
          %s3107 = scalar_lea.vmem [#allocation11], %s3106
          %3108 = dma.done %s3104, 896
        $region112: #{tpu_custom_call.1} parent=107 // pred_fallthru
          _
        // Predicated region
        $region113: #{tpu_custom_call.1} parent=107 // pred_check
          %p3109 = pneg %p392
        $region114: #{tpu_custom_call.1} parent=107 // pred_check_branch
          %3111 = sbr.rel (%p3109) target = $region116
        $region115: #{tpu_custom_call.1} parent=107 // pred_region
          %s3112 = sand.u32 %s377, 1
          %s3113 = scalar_lea.sflag [#allocation13], %s3112
          %s3114 = sand.u32 %s377, 1
          %s3115 = smul.addr %s3114, 16
          %s3116 = scalar_lea.vmem [#allocation12], %s3115
          %3117 = dma.done %s3113, 256
        $region116: #{tpu_custom_call.1} parent=107 // pred_fallthru
          _
      $region108: #{tpu_custom_call.1} parent=5 // pred_fallthru
        _
    $region6: #{tpu_custom_call.1} parent=1 // loop_footer
      %s37 = sadd.s32 1, %s33
    $region7: #{tpu_custom_call.1} parent=1 // loop_footer_branch
      %32 = sbr.rel target = $region3
    $region8: #{tpu_custom_call.1} parent=1 // loop_exit
      _
    %3118 = vsyncpa [#allocation3], 1
    %s3119 = scalar_lea.sflag [#allocation3], 1
    %3120 = vsyncpa %s3119, 1
    %3121 = vsyncpa [#allocation6], 1
    %3122 = vsyncpa [#allocation9], 1
    %3123 = vsyncpa [#allocation4], 1
    %s3124 = scalar_lea.sflag [#allocation4], 1
    %3125 = vsyncpa %s3124, 1
    %3126 = vsyncpa [#allocation13], 1
    %s3127 = scalar_lea.sflag [#allocation13], 1
    %3128 = vsyncpa %s3127, 1

</llo_original>
